<compile_context>
chip_gen: v5e
topology: v5e:2x2
jax: 0.10.0
libtpu: 0.0.40
codegen_flags: <defaults>
</compile_context>

<pallas_src>
import functools
import math

import jax
import jax.numpy as jnp
from jax import lax
from jax.experimental import pallas as pl
from jax.experimental.pallas import tpu as pltpu


def _layer_norm(t, eps=1e-5):
    # F.layer_norm(x, x.shape[1:]): normalize jointly over the whole (S, D) slab, no affine.
    # Two-pass variance (mean, then centered second moment) per the review's cancellation concern.
    mu = jnp.mean(t)
    xc = t - mu
    var = jnp.mean(xc * xc)
    return xc * lax.rsqrt(var + eps)


def _attention_heads(qkv, num_heads, d_model, compute_dtype, approx_recip, store):
    """Per-head scaled-dot-product attention on the fused-QKV activations.

    `qkv` is the (S, 3D) f32 result of the single fused projection x @ [Wq/sqrt(dk) | Wk | Wv];
    per-head q/k/v are static lane slices.  `store(h, oh_t)` receives head h's output already
    transposed to (dk, S): these are rows h*dk .. (h+1)*dk-1 of the contiguous buffer produced by
    the module's `attention_scores.transpose(-1, -2).contiguous()`.
    """
    f32 = jnp.float32
    dk = d_model // num_heads
    # TODO(synk): switch to lax.fori_loop over heads (dynamic pl.ds slices) for large H to bound
    # vreg live ranges; at small H the static unroll keeps everything visible to the scheduler.
    for h in range(num_heads):
        qh = qkv[:, h * dk:(h + 1) * dk]                              # already scaled by 1/sqrt(dk)
        kh = qkv[:, d_model + h * dk:d_model + (h + 1) * dk]
        vh = qkv[:, 2 * d_model + h * dk:2 * d_model + (h + 1) * dk]

        # scores = (q / sqrt(dk)) @ k^T  -> (S, S), f32 accumulation on the MXU.
        scores = lax.dot_general(qh.astype(compute_dtype), kh.astype(compute_dtype),
                                 (((1,), (1,)), ((), ())), preferred_element_type=f32)
        m = jnp.max(scores, axis=-1, keepdims=True)
        e = jnp.exp(scores - m)
        # TODO(synk): bf16 exp on v6e/v7x (bf16 EUP) once the accuracy budget is re-validated.
        p = e * pl.reciprocal(jnp.sum(e, axis=-1, keepdims=True), approx=approx_recip)

        # (softmax @ v)^T -> (dk, S), produced directly in the transposed layout (no XLU transpose).
        oh_t = lax.dot_general(vh.astype(compute_dtype), p.astype(compute_dtype),
                               (((0,), (1,)), ((), ())), preferred_element_type=f32)
        store(h, oh_t)


def _tail(a, res, w1_ref, b1_ref, w2_ref, b2_ref, compute_dtype):
    """residual + LayerNorm + FFN(ReLU) + residual + LayerNorm (one batch element)."""
    f32 = jnp.float32
    x1 = _layer_norm(a + res)
    h = jnp.maximum(
        jnp.dot(x1.astype(compute_dtype), w1_ref[...], preferred_element_type=f32) + b1_ref[...],
        0.0)
    ff = jnp.dot(h.astype(compute_dtype), w2_ref[...], preferred_element_type=f32) + b2_ref[...]
    return _layer_norm(ff + x1)


def _fused_encoder_kernel(num_heads, compute_dtype, approx_recip,
                          x_ref, wqkv_ref, bqkv_ref, wo_ref, bo_ref,
                          w1_ref, b1_ref, w2_ref, b2_ref,
                          o_ref, t_ref):
    """Whole EncoderLayer for one batch element; the scrambled attention intermediate stays in
    the (D, S) VMEM scratch `t_ref` and never round-trips HBM."""
    x = x_ref[0]                               # (S, D) f32
    S, D = x.shape
    dk = D // num_heads
    R = D // S                                 # wrapper guarantees D % S == 0 on this path
    f32 = jnp.float32

    # Single fused, lane-dense QKV projection (1/sqrt(dk) pre-folded into the Wq / bq columns).
    qkv = jnp.dot(x.astype(compute_dtype), wqkv_ref[...],
                  preferred_element_type=f32) + bqkv_ref[...]        # (S, 3D) f32

    def store(h, oh_t):
        t_ref[h * dk:(h + 1) * dk, :] = oh_t

    _attention_heads(qkv, num_heads, D, compute_dtype, approx_recip, store)

    # The module's `transpose(-1,-2).contiguous().view(B, S, D)` is a flat reinterpretation of
    # t_ref (D, S) as (S, D):  combined[s, r*S + c] = t_ref[s*R + r, c].  Fold it into the w_o
    # projection as a block decomposition over the contraction dim (strided-row matmuls).
    # TODO(synk): per the review, consider a residue-major (R, S, S) store layout instead of the
    # sublane-strided reads if MLIR shows relayout copies here at production sizes.
    a = bo_ref[...]                            # (1, D); broadcasts over (S, D)
    for r in range(R):
        rows = t_ref[pl.ds(r, S, stride=R), :]                       # rows r, r+R, ... -> (S, S)
        a = a + jnp.dot(rows.astype(compute_dtype), wo_ref[r * S:(r + 1) * S, :],
                        preferred_element_type=f32)

    o_ref[0] = _tail(a, x, w1_ref, b1_ref, w2_ref, b2_ref, compute_dtype).astype(o_ref.dtype)


# ----------------------- general-shape fallback (D % S != 0) -----------------------

def _mha_kernel(num_heads, compute_dtype, approx_recip, x_ref, wqkv_ref, bqkv_ref, o_ref):
    """Fallback stage 1: per-head transposed outputs written as a (D, S) slab."""
    x = x_ref[0]
    S, D = x.shape
    dk = D // num_heads
    qkv = jnp.dot(x.astype(compute_dtype), wqkv_ref[...],
                  preferred_element_type=jnp.float32) + bqkv_ref[...]

    def store(h, oh_t):
        o_ref[0, h * dk:(h + 1) * dk, :] = oh_t.astype(o_ref.dtype)

    _attention_heads(qkv, num_heads, D, compute_dtype, approx_recip, store)


def _proj_ffn_kernel(compute_dtype, comb_ref, res_ref, wo_ref, bo_ref,
                     w1_ref, b1_ref, w2_ref, b2_ref, o_ref):
    """Fallback stage 2: w_o projection + residuals + layer norms + FFN."""
    f32 = jnp.float32
    a = jnp.dot(comb_ref[0].astype(compute_dtype), wo_ref[...],
                preferred_element_type=f32) + bo_ref[...]
    o_ref[0] = _tail(a, res_ref[0], w1_ref, b1_ref, w2_ref, b2_ref,
                     compute_dtype).astype(o_ref.dtype)


# ----------------------------------- wrapper -----------------------------------

def _full_spec(shape):
    n = len(shape)
    return pl.BlockSpec(shape, lambda b, _n=n: (0,) * _n)


def _prep_weights(params, num_heads, compute_dtype):
    """Fuse Q/K/V weights (1/sqrt(dk) folded into the Q columns) and cast matmul weights to the
    MXU compute dtype; biases stay f32 (they are added to f32 accumulators)."""
    D = params['wq'].shape[0]
    inv_sqrt_dk = 1.0 / math.sqrt(D // num_heads)
    wqkv = jnp.concatenate(
        [params['wq'] * inv_sqrt_dk, params['wk'], params['wv']], axis=1).astype(compute_dtype)
    bqkv = jnp.concatenate(
        [params['bq'] * inv_sqrt_dk, params['bk'], params['bv']], axis=1).astype(jnp.float32)
    wo = params['wo'].astype(compute_dtype)
    w1 = params['w1'].astype(compute_dtype)
    w2 = params['w2'].astype(compute_dtype)
    bo = params['bo'].astype(jnp.float32)
    b1 = params['b1'].astype(jnp.float32)
    b2 = params['b2'].astype(jnp.float32)
    return [wqkv, bqkv, wo, bo, w1, b1, w2, b2]


def encoder_layer_forward(x, params, num_heads, compute_dtype=jnp.bfloat16):
    B, S, D = x.shape
    FF = params['w1'].shape[1]
    assert D % num_heads == 0, "d_model must be divisible by num_heads"

    weights = _prep_weights(params, num_heads, compute_dtype)
    approx_recip = jnp.dtype(compute_dtype) != jnp.dtype(jnp.float32)
    wbytes = jnp.dtype(compute_dtype).itemsize

    flops = 2 * B * S * D * (4 * D + 2 * S + 2 * FF)
    bytes_accessed = (4 * 2 * B * S * D                        # x in + out (f32)
                      + wbytes * (4 * D * D + 2 * D * FF)      # matmul weights (compute dtype)
                      + 4 * (5 * D + FF))                      # biases (f32)
    cost = pl.CostEstimate(flops=int(flops), transcendentals=int(B * num_heads * S * S),
                           bytes_accessed=int(bytes_accessed))

    # Explicit VMEM budget: double-buffered weight blocks + x/out blocks + scratch + working set,
    # floored at 32 MiB (>= every generation's scoped default) and capped at 48 MiB to leave
    # headroom on v7x's 64 MiB physical VMEM.  v5e/v6e (128 MiB) could go higher at prod sizes.
    est = (2 * wbytes * (3 * D * D + D * D + 2 * D * FF)       # weights, double-buffered
           + 2 * 4 * (3 * D + 2 * D + FF)                      # biases, double-buffered
           + 2 * 2 * 4 * S * D                                 # x / out blocks, double-buffered
           + 4 * D * S                                         # t_ref scratch
           + 4 * S * (3 * D + S + FF + 4 * D)                  # in-kernel temporaries
           + (4 << 20))
    vmem_limit = int(min(max(est, 32 << 20), 48 << 20))
    cparams = pltpu.CompilerParams(dimension_semantics=("parallel",),
                                   vmem_limit_bytes=vmem_limit)

    x_spec = pl.BlockSpec((1, S, D), lambda b: (b, 0, 0))
    weight_specs = [_full_spec(w.shape) for w in weights]

    if D % S == 0:
        # Fused fast path: one kernel per batch element; attention intermediate kept in VMEM.
        return pl.pallas_call(
            functools.partial(_fused_encoder_kernel, num_heads, compute_dtype, approx_recip),
            out_shape=jax.ShapeDtypeStruct((B, S, D), jnp.float32),
            grid=(B,),
            in_specs=[x_spec] + weight_specs,
            out_specs=x_spec,
            scratch_shapes=[pltpu.VMEM((D, S), jnp.float32)],
            compiler_params=cparams,
            cost_estimate=cost,
        )(x, *weights)

    # Fallback: the flat (D,S)->(S,D) reinterpretation is a free XLA reshape between two calls.
    heads_ds = pl.pallas_call(
        functools.partial(_mha_kernel, num_heads, compute_dtype, approx_recip),
        out_shape=jax.ShapeDtypeStruct((B, D, S), jnp.float32),
        grid=(B,),
        in_specs=[x_spec, weight_specs[0], weight_specs[1]],
        out_specs=pl.BlockSpec((1, D, S), lambda b: (b, 0, 0)),
        compiler_params=cparams,
    )(x, weights[0], weights[1])
    combined = heads_ds.reshape(B, S, D)                       # contiguous view, no data movement
    return pl.pallas_call(
        functools.partial(_proj_ffn_kernel, compute_dtype),
        out_shape=jax.ShapeDtypeStruct((B, S, D), jnp.float32),
        grid=(B,),
        in_specs=[x_spec, x_spec] + weight_specs[2:],
        out_specs=x_spec,
        compiler_params=cparams,
    )(combined, x, *weights[2:])


# ----------------------------------- reference -----------------------------------

def _reference(x, p, num_heads):
    """Pure-JAX replica of the PyTorch EncoderLayer.forward (correctness check)."""
    B, S, D = x.shape
    dk = D // num_heads
    hp = lax.Precision.HIGHEST

    def lin(v, w, b):
        return jnp.dot(v, w, precision=hp) + b

    q = lin(x, p['wq'], p['bq']).reshape(B, S, num_heads, dk).transpose(0, 2, 1, 3)
    k = lin(x, p['wk'], p['bk']).reshape(B, S, num_heads, dk).transpose(0, 2, 1, 3)
    v = lin(x, p['wv'], p['bv']).reshape(B, S, num_heads, dk).transpose(0, 2, 1, 3)
    scores = jnp.einsum('bhqd,bhkd->bhqk', q, k, precision=hp) / math.sqrt(dk)
    attn = jnp.einsum('bhqk,bhkd->bhqd', jax.nn.softmax(scores, axis=-1), v, precision=hp)
    comb = jnp.swapaxes(attn, -1, -2).reshape(B, S, D)         # the module's odd transpose+view

    def ln(t):
        mu = jnp.mean(t, axis=(1, 2), keepdims=True)
        var = jnp.mean((t - mu) ** 2, axis=(1, 2), keepdims=True)
        return (t - mu) / jnp.sqrt(var + 1e-5)

    x1 = ln(lin(comb, p['wo'], p['bo']) + x)
    h = jnp.maximum(lin(x1, p['w1'], p['b1']), 0.0)
    return ln(lin(h, p['w2'], p['b2']) + x1)


if __name__ == "__main__":
    B, S, D, H, FF = 2, 8, 32, 4, 64   # batch=2, seq=8, d_model=32, heads=4, d_ff=64

    key = jax.random.PRNGKey(0)
    ks = jax.random.split(key, 13)

    def lin_init(kw, kb, fan_in, fan_out):
        # nn.Linear-style uniform(-1/sqrt(fan_in), 1/sqrt(fan_in)); weight stored (in, out).
        bound = 1.0 / math.sqrt(fan_in)
        w = jax.random.uniform(kw, (fan_in, fan_out), jnp.float32, -bound, bound)
        b = jax.random.uniform(kb, (1, fan_out), jnp.float32, -bound, bound)
        return w, b

    params = {}
    params['wq'], params['bq'] = lin_init(ks[0], ks[1], D, D)
    params['wk'], params['bk'] = lin_init(ks[2], ks[3], D, D)
    params['wv'], params['bv'] = lin_init(ks[4], ks[5], D, D)
    params['wo'], params['bo'] = lin_init(ks[6], ks[7], D, D)
    params['w1'], params['b1'] = lin_init(ks[8], ks[9], D, FF)
    params['w2'], params['b2'] = lin_init(ks[10], ks[11], FF, D)

    x = jax.random.normal(ks[12], (B, S, D), jnp.float32)

    ref = _reference(x, params, H)

    # Exact semantics check: f32 MXU mode against the pure-JAX reference at the tight budget.
    out_f32 = jax.block_until_ready(
        encoder_layer_forward(x, params, H, compute_dtype=jnp.float32))
    assert out_f32.shape == (B, S, D)
    assert bool(jnp.all(jnp.isfinite(out_f32)))
    if not jnp.allclose(out_f32, ref, atol=2e-3, rtol=2e-3):
        raise AssertionError(
            f"f32 kernel/ref mismatch, max abs diff = {float(jnp.max(jnp.abs(out_f32 - ref)))}")

    # Default perf path: bf16 MXU inputs + f32 accumulation + approx reciprocal.  Budget relaxed
    # to a bf16-appropriate level (the exact-semantics check above already ran at 2e-3).
    out_bf16 = jax.block_until_ready(encoder_layer_forward(x, params, H))
    assert out_bf16.shape == (B, S, D)
    assert bool(jnp.all(jnp.isfinite(out_bf16)))
    if not jnp.allclose(out_bf16, ref, atol=5e-2, rtol=5e-2):
        raise AssertionError(
            f"bf16 kernel/ref mismatch, max abs diff = {float(jnp.max(jnp.abs(out_bf16 - ref)))}")

    print("KERNEL_OK")
</pallas_src>

<mosaic_0001>
module attributes {stable_mosaic.version = 11 : i64} {
  func.func @_fused_encoder_kernel(%arg0: i32, %arg1: memref<1x8x32xf32, #tpu.memory_space<vmem>>, %arg2: memref<32x96xf32, #tpu.memory_space<vmem>>, %arg3: memref<1x96xf32, #tpu.memory_space<vmem>>, %arg4: memref<32x32xf32, #tpu.memory_space<vmem>>, %arg5: memref<1x32xf32, #tpu.memory_space<vmem>>, %arg6: memref<32x64xf32, #tpu.memory_space<vmem>>, %arg7: memref<1x64xf32, #tpu.memory_space<vmem>>, %arg8: memref<64x32xf32, #tpu.memory_space<vmem>>, %arg9: memref<1x32xf32, #tpu.memory_space<vmem>>, %arg10: memref<1x8x32xf32, #tpu.memory_space<vmem>>, %arg11: memref<32x8xf32, #tpu.memory_space<vmem>>) attributes {dimension_semantics = [#tpu.dimension_semantics<parallel>], iteration_bounds = array<i64: 2>, scalar_prefetch = 0 : i64, scratch_operands = 1 : i64, tpu.core_type = #tpu.core_type<tc>, window_params = [{transform_indices = @transform_0, window_bounds = array<i64: 1, 8, 32>}, {pipeline_mode = #tpu.pipeline_mode<synchronous>, transform_indices = @transform_1, window_bounds = array<i64: 32, 96>}, {pipeline_mode = #tpu.pipeline_mode<synchronous>, transform_indices = @transform_2, window_bounds = array<i64: 1, 96>}, {pipeline_mode = #tpu.pipeline_mode<synchronous>, transform_indices = @transform_3, window_bounds = array<i64: 32, 32>}, {pipeline_mode = #tpu.pipeline_mode<synchronous>, transform_indices = @transform_4, window_bounds = array<i64: 1, 32>}, {pipeline_mode = #tpu.pipeline_mode<synchronous>, transform_indices = @transform_5, window_bounds = array<i64: 32, 64>}, {pipeline_mode = #tpu.pipeline_mode<synchronous>, transform_indices = @transform_6, window_bounds = array<i64: 1, 64>}, {pipeline_mode = #tpu.pipeline_mode<synchronous>, transform_indices = @transform_7, window_bounds = array<i64: 64, 32>}, {pipeline_mode = #tpu.pipeline_mode<synchronous>, transform_indices = @transform_8, window_bounds = array<i64: 1, 32>}, {transform_indices = @transform_9, window_bounds = array<i64: 1, 8, 32>}]} {
    %c0 = arith.constant 0 : index
    %c0_0 = arith.constant 0 : index
    %c0_1 = arith.constant 0 : index
    %0 = vector.load %arg1[%c0, %c0_0, %c0_1] : memref<1x8x32xf32, #tpu.memory_space<vmem>>, vector<1x8x32xf32>
    %1 = vector.shape_cast %0 : vector<1x8x32xf32> to vector<8x32xf32>
    %c0_2 = arith.constant 0 : index
    %c0_3 = arith.constant 0 : index
    %2 = vector.load %arg2[%c0_2, %c0_3] : memref<32x96xf32, #tpu.memory_space<vmem>>, vector<32x96xf32>
    %cst = arith.constant dense<0.000000e+00> : vector<8x96xf32>
    %3 = tpu.matmul %1, %2, %cst {dimension_numbers = #tpu.dot_dimension_numbers<[1], [0], [0], [1], [0, 0, 1, 1], [], []>} : vector<8x32xf32>, vector<32x96xf32>, vector<8x96xf32> -> vector<8x96xf32>
    %c0_4 = arith.constant 0 : index
    %c0_5 = arith.constant 0 : index
    %4 = vector.load %arg3[%c0_4, %c0_5] : memref<1x96xf32, #tpu.memory_space<vmem>>, vector<1x96xf32>
    %5 = vector.broadcast %4 : vector<1x96xf32> to vector<8x96xf32>
    %6 = arith.addf %3, %5 : vector<8x96xf32>
    %7 = vector.extract_strided_slice %6 {offsets = [0, 0], sizes = [8, 8], strides = [1, 1]} : vector<8x96xf32> to vector<8x8xf32>
    %8 = vector.extract_strided_slice %6 {offsets = [0, 32], sizes = [8, 8], strides = [1, 1]} : vector<8x96xf32> to vector<8x8xf32>
    %9 = vector.extract_strided_slice %6 {offsets = [0, 64], sizes = [8, 8], strides = [1, 1]} : vector<8x96xf32> to vector<8x8xf32>
    %cst_6 = arith.constant dense<0.000000e+00> : vector<8x8xf32>
    %10 = tpu.matmul %7, %8, %cst_6 {dimension_numbers = #tpu.dot_dimension_numbers<[1], [1], [0], [0], [0, 0, 1, 0], [], []>} : vector<8x8xf32>, vector<8x8xf32>, vector<8x8xf32> -> vector<8x8xf32>
    %cst_7 = arith.constant dense<0xFF800000> : vector<8xf32>
    %11 = vector.multi_reduction <maximumf>, %10, %cst_7 [1] : vector<8x8xf32> to vector<8xf32>
    %12 = vector.shape_cast %11 : vector<8xf32> to vector<8x1xf32>
    %13 = vector.broadcast %12 : vector<8x1xf32> to vector<8x8xf32>
    %14 = arith.subf %10, %13 : vector<8x8xf32>
    %15 = math.exp %14 : vector<8x8xf32>
    %cst_8 = arith.constant dense<0.000000e+00> : vector<8xf32>
    %16 = vector.multi_reduction <add>, %15, %cst_8 [1] : vector<8x8xf32> to vector<8xf32>
    %17 = vector.shape_cast %16 : vector<8xf32> to vector<8x1xf32>
    %18 = tpu.reciprocal %17 : vector<8x1xf32> -> vector<8x1xf32>
    %19 = vector.broadcast %18 : vector<8x1xf32> to vector<8x8xf32>
    %20 = arith.mulf %15, %19 : vector<8x8xf32>
    %cst_9 = arith.constant dense<0.000000e+00> : vector<8x8xf32>
    %21 = tpu.matmul %9, %20, %cst_9 {dimension_numbers = #tpu.dot_dimension_numbers<[0], [1], [1], [0], [0, 1, 1, 0], [], []>} : vector<8x8xf32>, vector<8x8xf32>, vector<8x8xf32> -> vector<8x8xf32>
    %c0_10 = arith.constant 0 : index
    %c0_11 = arith.constant 0 : index
    %22 = vector.load %arg11[%c0_10, %c0_11] : memref<32x8xf32, #tpu.memory_space<vmem>>, vector<8x8xf32>
    tpu.vector_store %arg11[%c0_10, %c0_11], %21 {strides = array<i32>} : memref<32x8xf32, #tpu.memory_space<vmem>>, vector<8x8xf32>,
    %23 = vector.extract_strided_slice %6 {offsets = [0, 8], sizes = [8, 8], strides = [1, 1]} : vector<8x96xf32> to vector<8x8xf32>
    %24 = vector.extract_strided_slice %6 {offsets = [0, 40], sizes = [8, 8], strides = [1, 1]} : vector<8x96xf32> to vector<8x8xf32>
    %25 = vector.extract_strided_slice %6 {offsets = [0, 72], sizes = [8, 8], strides = [1, 1]} : vector<8x96xf32> to vector<8x8xf32>
    %cst_12 = arith.constant dense<0.000000e+00> : vector<8x8xf32>
    %26 = tpu.matmul %23, %24, %cst_12 {dimension_numbers = #tpu.dot_dimension_numbers<[1], [1], [0], [0], [0, 0, 1, 0], [], []>} : vector<8x8xf32>, vector<8x8xf32>, vector<8x8xf32> -> vector<8x8xf32>
    %cst_13 = arith.constant dense<0xFF800000> : vector<8xf32>
    %27 = vector.multi_reduction <maximumf>, %26, %cst_13 [1] : vector<8x8xf32> to vector<8xf32>
    %28 = vector.shape_cast %27 : vector<8xf32> to vector<8x1xf32>
    %29 = vector.broadcast %28 : vector<8x1xf32> to vector<8x8xf32>
    %30 = arith.subf %26, %29 : vector<8x8xf32>
    %31 = math.exp %30 : vector<8x8xf32>
    %cst_14 = arith.constant dense<0.000000e+00> : vector<8xf32>
    %32 = vector.multi_reduction <add>, %31, %cst_14 [1] : vector<8x8xf32> to vector<8xf32>
    %33 = vector.shape_cast %32 : vector<8xf32> to vector<8x1xf32>
    %34 = tpu.reciprocal %33 : vector<8x1xf32> -> vector<8x1xf32>
    %35 = vector.broadcast %34 : vector<8x1xf32> to vector<8x8xf32>
    %36 = arith.mulf %31, %35 : vector<8x8xf32>
    %cst_15 = arith.constant dense<0.000000e+00> : vector<8x8xf32>
    %37 = tpu.matmul %25, %36, %cst_15 {dimension_numbers = #tpu.dot_dimension_numbers<[0], [1], [1], [0], [0, 1, 1, 0], [], []>} : vector<8x8xf32>, vector<8x8xf32>, vector<8x8xf32> -> vector<8x8xf32>
    %c8 = arith.constant 8 : index
    %c0_16 = arith.constant 0 : index
    %38 = vector.load %arg11[%c8, %c0_16] : memref<32x8xf32, #tpu.memory_space<vmem>>, vector<8x8xf32>
    tpu.vector_store %arg11[%c8, %c0_16], %37 {strides = array<i32>} : memref<32x8xf32, #tpu.memory_space<vmem>>, vector<8x8xf32>,
    %39 = vector.extract_strided_slice %6 {offsets = [0, 16], sizes = [8, 8], strides = [1, 1]} : vector<8x96xf32> to vector<8x8xf32>
    %40 = vector.extract_strided_slice %6 {offsets = [0, 48], sizes = [8, 8], strides = [1, 1]} : vector<8x96xf32> to vector<8x8xf32>
    %41 = vector.extract_strided_slice %6 {offsets = [0, 80], sizes = [8, 8], strides = [1, 1]} : vector<8x96xf32> to vector<8x8xf32>
    %cst_17 = arith.constant dense<0.000000e+00> : vector<8x8xf32>
    %42 = tpu.matmul %39, %40, %cst_17 {dimension_numbers = #tpu.dot_dimension_numbers<[1], [1], [0], [0], [0, 0, 1, 0], [], []>} : vector<8x8xf32>, vector<8x8xf32>, vector<8x8xf32> -> vector<8x8xf32>
    %cst_18 = arith.constant dense<0xFF800000> : vector<8xf32>
    %43 = vector.multi_reduction <maximumf>, %42, %cst_18 [1] : vector<8x8xf32> to vector<8xf32>
    %44 = vector.shape_cast %43 : vector<8xf32> to vector<8x1xf32>
    %45 = vector.broadcast %44 : vector<8x1xf32> to vector<8x8xf32>
    %46 = arith.subf %42, %45 : vector<8x8xf32>
    %47 = math.exp %46 : vector<8x8xf32>
    %cst_19 = arith.constant dense<0.000000e+00> : vector<8xf32>
    %48 = vector.multi_reduction <add>, %47, %cst_19 [1] : vector<8x8xf32> to vector<8xf32>
    %49 = vector.shape_cast %48 : vector<8xf32> to vector<8x1xf32>
    %50 = tpu.reciprocal %49 : vector<8x1xf32> -> vector<8x1xf32>
    %51 = vector.broadcast %50 : vector<8x1xf32> to vector<8x8xf32>
    %52 = arith.mulf %47, %51 : vector<8x8xf32>
    %cst_20 = arith.constant dense<0.000000e+00> : vector<8x8xf32>
    %53 = tpu.matmul %41, %52, %cst_20 {dimension_numbers = #tpu.dot_dimension_numbers<[0], [1], [1], [0], [0, 1, 1, 0], [], []>} : vector<8x8xf32>, vector<8x8xf32>, vector<8x8xf32> -> vector<8x8xf32>
    %c16 = arith.constant 16 : index
    %c0_21 = arith.constant 0 : index
    %54 = vector.load %arg11[%c16, %c0_21] : memref<32x8xf32, #tpu.memory_space<vmem>>, vector<8x8xf32>
    tpu.vector_store %arg11[%c16, %c0_21], %53 {strides = array<i32>} : memref<32x8xf32, #tpu.memory_space<vmem>>, vector<8x8xf32>,
    %55 = vector.extract_strided_slice %6 {offsets = [0, 24], sizes = [8, 8], strides = [1, 1]} : vector<8x96xf32> to vector<8x8xf32>
    %56 = vector.extract_strided_slice %6 {offsets = [0, 56], sizes = [8, 8], strides = [1, 1]} : vector<8x96xf32> to vector<8x8xf32>
    %57 = vector.extract_strided_slice %6 {offsets = [0, 88], sizes = [8, 8], strides = [1, 1]} : vector<8x96xf32> to vector<8x8xf32>
    %cst_22 = arith.constant dense<0.000000e+00> : vector<8x8xf32>
    %58 = tpu.matmul %55, %56, %cst_22 {dimension_numbers = #tpu.dot_dimension_numbers<[1], [1], [0], [0], [0, 0, 1, 0], [], []>} : vector<8x8xf32>, vector<8x8xf32>, vector<8x8xf32> -> vector<8x8xf32>
    %cst_23 = arith.constant dense<0xFF800000> : vector<8xf32>
    %59 = vector.multi_reduction <maximumf>, %58, %cst_23 [1] : vector<8x8xf32> to vector<8xf32>
    %60 = vector.shape_cast %59 : vector<8xf32> to vector<8x1xf32>
    %61 = vector.broadcast %60 : vector<8x1xf32> to vector<8x8xf32>
    %62 = arith.subf %58, %61 : vector<8x8xf32>
    %63 = math.exp %62 : vector<8x8xf32>
    %cst_24 = arith.constant dense<0.000000e+00> : vector<8xf32>
    %64 = vector.multi_reduction <add>, %63, %cst_24 [1] : vector<8x8xf32> to vector<8xf32>
    %65 = vector.shape_cast %64 : vector<8xf32> to vector<8x1xf32>
    %66 = tpu.reciprocal %65 : vector<8x1xf32> -> vector<8x1xf32>
    %67 = vector.broadcast %66 : vector<8x1xf32> to vector<8x8xf32>
    %68 = arith.mulf %63, %67 : vector<8x8xf32>
    %cst_25 = arith.constant dense<0.000000e+00> : vector<8x8xf32>
    %69 = tpu.matmul %57, %68, %cst_25 {dimension_numbers = #tpu.dot_dimension_numbers<[0], [1], [1], [0], [0, 1, 1, 0], [], []>} : vector<8x8xf32>, vector<8x8xf32>, vector<8x8xf32> -> vector<8x8xf32>
    %c24 = arith.constant 24 : index
    %c0_26 = arith.constant 0 : index
    %70 = vector.load %arg11[%c24, %c0_26] : memref<32x8xf32, #tpu.memory_space<vmem>>, vector<8x8xf32>
    tpu.vector_store %arg11[%c24, %c0_26], %69 {strides = array<i32>} : memref<32x8xf32, #tpu.memory_space<vmem>>, vector<8x8xf32>,
    %c0_27 = arith.constant 0 : index
    %c0_28 = arith.constant 0 : index
    %71 = vector.load %arg5[%c0_27, %c0_28] : memref<1x32xf32, #tpu.memory_space<vmem>>, vector<1x32xf32>
    %c0_29 = arith.constant 0 : index
    %c0_30 = arith.constant 0 : index
    %72 = tpu.strided_load %arg11[%c0_29, %c0_30] {strides = array<i32: 4, 1>} : memref<32x8xf32, #tpu.memory_space<vmem>>, vector<8x8xf32>
    %c0_31 = arith.constant 0 : index
    %c0_32 = arith.constant 0 : index
    %73 = vector.load %arg4[%c0_31, %c0_32] : memref<32x32xf32, #tpu.memory_space<vmem>>, vector<8x32xf32>
    %cst_33 = arith.constant dense<0.000000e+00> : vector<8x32xf32>
    %74 = tpu.matmul %72, %73, %cst_33 {dimension_numbers = #tpu.dot_dimension_numbers<[1], [0], [0], [1], [0, 0, 1, 1], [], []>} : vector<8x8xf32>, vector<8x32xf32>, vector<8x32xf32> -> vector<8x32xf32>
    %75 = vector.broadcast %71 : vector<1x32xf32> to vector<8x32xf32>
    %76 = arith.addf %75, %74 : vector<8x32xf32>
    %c1 = arith.constant 1 : index
    %c0_34 = arith.constant 0 : index
    %77 = tpu.strided_load %arg11[%c1, %c0_34] {strides = array<i32: 4, 1>} : memref<32x8xf32, #tpu.memory_space<vmem>>, vector<8x8xf32>
    %c8_35 = arith.constant 8 : index
    %c0_36 = arith.constant 0 : index
    %78 = vector.load %arg4[%c8_35, %c0_36] : memref<32x32xf32, #tpu.memory_space<vmem>>, vector<8x32xf32>
    %cst_37 = arith.constant dense<0.000000e+00> : vector<8x32xf32>
    %79 = tpu.matmul %77, %78, %cst_37 {dimension_numbers = #tpu.dot_dimension_numbers<[1], [0], [0], [1], [0, 0, 1, 1], [], []>} : vector<8x8xf32>, vector<8x32xf32>, vector<8x32xf32> -> vector<8x32xf32>
    %80 = arith.addf %76, %79 : vector<8x32xf32>
    %c2 = arith.constant 2 : index
    %c0_38 = arith.constant 0 : index
    %81 = tpu.strided_load %arg11[%c2, %c0_38] {strides = array<i32: 4, 1>} : memref<32x8xf32, #tpu.memory_space<vmem>>, vector<8x8xf32>
    %c16_39 = arith.constant 16 : index
    %c0_40 = arith.constant 0 : index
    %82 = vector.load %arg4[%c16_39, %c0_40] : memref<32x32xf32, #tpu.memory_space<vmem>>, vector<8x32xf32>
    %cst_41 = arith.constant dense<0.000000e+00> : vector<8x32xf32>
    %83 = tpu.matmul %81, %82, %cst_41 {dimension_numbers = #tpu.dot_dimension_numbers<[1], [0], [0], [1], [0, 0, 1, 1], [], []>} : vector<8x8xf32>, vector<8x32xf32>, vector<8x32xf32> -> vector<8x32xf32>
    %84 = arith.addf %80, %83 : vector<8x32xf32>
    %c3 = arith.constant 3 : index
    %c0_42 = arith.constant 0 : index
    %85 = tpu.strided_load %arg11[%c3, %c0_42] {strides = array<i32: 4, 1>} : memref<32x8xf32, #tpu.memory_space<vmem>>, vector<8x8xf32>
    %c24_43 = arith.constant 24 : index
    %c0_44 = arith.constant 0 : index
    %86 = vector.load %arg4[%c24_43, %c0_44] : memref<32x32xf32, #tpu.memory_space<vmem>>, vector<8x32xf32>
    %cst_45 = arith.constant dense<0.000000e+00> : vector<8x32xf32>
    %87 = tpu.matmul %85, %86, %cst_45 {dimension_numbers = #tpu.dot_dimension_numbers<[1], [0], [0], [1], [0, 0, 1, 1], [], []>} : vector<8x8xf32>, vector<8x32xf32>, vector<8x32xf32> -> vector<8x32xf32>
    %88 = arith.addf %84, %87 : vector<8x32xf32>
    %89 = arith.addf %88, %1 : vector<8x32xf32>
    %90 = vector.shape_cast %89 : vector<8x32xf32> to vector<1x8x32xf32>
    %cst_46 = arith.constant dense<0.000000e+00> : vector<1xf32>
    %91 = vector.multi_reduction <add>, %90, %cst_46 [1, 2] : vector<1x8x32xf32> to vector<1xf32>
    %92 = vector.shape_cast %91 : vector<1xf32> to vector<1x1x1xf32>
    %93 = vector.extract %92[0, 0, 0] : f32 from vector<1x1x1xf32>
    %cst_47 = arith.constant 2.560000e+02 : f32
    %94 = arith.divf %93, %cst_47 : f32
    %95 = vector.broadcast %94 : f32 to vector<8x32xf32>
    %96 = arith.subf %89, %95 : vector<8x32xf32>
    %97 = arith.mulf %96, %96 : vector<8x32xf32>
    %98 = vector.shape_cast %97 : vector<8x32xf32> to vector<1x8x32xf32>
    %cst_48 = arith.constant dense<0.000000e+00> : vector<1xf32>
    %99 = vector.multi_reduction <add>, %98, %cst_48 [1, 2] : vector<1x8x32xf32> to vector<1xf32>
    %100 = vector.shape_cast %99 : vector<1xf32> to vector<1x1x1xf32>
    %101 = vector.extract %100[0, 0, 0] : f32 from vector<1x1x1xf32>
    %cst_49 = arith.constant 2.560000e+02 : f32
    %102 = arith.divf %101, %cst_49 : f32
    %cst_50 = arith.constant 9.99999974E-6 : f32
    %103 = arith.addf %102, %cst_50 : f32
    %104 = math.rsqrt %103 : f32
    %105 = vector.broadcast %104 : f32 to vector<8x32xf32>
    %106 = arith.mulf %96, %105 : vector<8x32xf32>
    %c0_51 = arith.constant 0 : index
    %c0_52 = arith.constant 0 : index
    %107 = vector.load %arg6[%c0_51, %c0_52] : memref<32x64xf32, #tpu.memory_space<vmem>>, vector<32x64xf32>
    %cst_53 = arith.constant dense<0.000000e+00> : vector<8x64xf32>
    %108 = tpu.matmul %106, %107, %cst_53 {dimension_numbers = #tpu.dot_dimension_numbers<[1], [0], [0], [1], [0, 0, 1, 1], [], []>} : vector<8x32xf32>, vector<32x64xf32>, vector<8x64xf32> -> vector<8x64xf32>
    %c0_54 = arith.constant 0 : index
    %c0_55 = arith.constant 0 : index
    %109 = vector.load %arg7[%c0_54, %c0_55] : memref<1x64xf32, #tpu.memory_space<vmem>>, vector<1x64xf32>
    %110 = vector.broadcast %109 : vector<1x64xf32> to vector<8x64xf32>
    %111 = arith.addf %108, %110 : vector<8x64xf32>
    %cst_56 = arith.constant 0.000000e+00 : f32
    %112 = vector.broadcast %cst_56 : f32 to vector<8x64xf32>
    %113 = arith.maximumf %111, %112 : vector<8x64xf32>
    %c0_57 = arith.constant 0 : index
    %c0_58 = arith.constant 0 : index
    %114 = vector.load %arg8[%c0_57, %c0_58] : memref<64x32xf32, #tpu.memory_space<vmem>>, vector<64x32xf32>
    %cst_59 = arith.constant dense<0.000000e+00> : vector<8x32xf32>
    %115 = tpu.matmul %113, %114, %cst_59 {dimension_numbers = #tpu.dot_dimension_numbers<[1], [0], [0], [1], [0, 0, 1, 1], [], []>} : vector<8x64xf32>, vector<64x32xf32>, vector<8x32xf32> -> vector<8x32xf32>
    %c0_60 = arith.constant 0 : index
    %c0_61 = arith.constant 0 : index
    %116 = vector.load %arg9[%c0_60, %c0_61] : memref<1x32xf32, #tpu.memory_space<vmem>>, vector<1x32xf32>
    %117 = vector.broadcast %116 : vector<1x32xf32> to vector<8x32xf32>
    %118 = arith.addf %115, %117 : vector<8x32xf32>
    %119 = arith.addf %118, %106 : vector<8x32xf32>
    %120 = vector.shape_cast %119 : vector<8x32xf32> to vector<1x8x32xf32>
    %cst_62 = arith.constant dense<0.000000e+00> : vector<1xf32>
    %121 = vector.multi_reduction <add>, %120, %cst_62 [1, 2] : vector<1x8x32xf32> to vector<1xf32>
    %122 = vector.shape_cast %121 : vector<1xf32> to vector<1x1x1xf32>
    %123 = vector.extract %122[0, 0, 0] : f32 from vector<1x1x1xf32>
    %cst_63 = arith.constant 2.560000e+02 : f32
    %124 = arith.divf %123, %cst_63 : f32
    %125 = vector.broadcast %124 : f32 to vector<8x32xf32>
    %126 = arith.subf %119, %125 : vector<8x32xf32>
    %127 = arith.mulf %126, %126 : vector<8x32xf32>
    %128 = vector.shape_cast %127 : vector<8x32xf32> to vector<1x8x32xf32>
    %cst_64 = arith.constant dense<0.000000e+00> : vector<1xf32>
    %129 = vector.multi_reduction <add>, %128, %cst_64 [1, 2] : vector<1x8x32xf32> to vector<1xf32>
    %130 = vector.shape_cast %129 : vector<1xf32> to vector<1x1x1xf32>
    %131 = vector.extract %130[0, 0, 0] : f32 from vector<1x1x1xf32>
    %cst_65 = arith.constant 2.560000e+02 : f32
    %132 = arith.divf %131, %cst_65 : f32
    %cst_66 = arith.constant 9.99999974E-6 : f32
    %133 = arith.addf %132, %cst_66 : f32
    %134 = math.rsqrt %133 : f32
    %135 = vector.broadcast %134 : f32 to vector<8x32xf32>
    %136 = arith.mulf %126, %135 : vector<8x32xf32>
    %c0_67 = arith.constant 0 : index
    %c0_68 = arith.constant 0 : index
    %c0_69 = arith.constant 0 : index
    %137 = vector.load %arg10[%c0_67, %c0_68, %c0_69] : memref<1x8x32xf32, #tpu.memory_space<vmem>>, vector<1x8x32xf32>
    %138 = vector.shape_cast %137 : vector<1x8x32xf32> to vector<8x32xf32>
    %139 = vector.shape_cast %136 : vector<8x32xf32> to vector<1x8x32xf32>
    tpu.vector_store %arg10[%c0_67, %c0_68, %c0_69], %139 {strides = array<i32>} : memref<1x8x32xf32, #tpu.memory_space<vmem>>, vector<1x8x32xf32>,
    return
  }
  func.func @transform_0(%arg0: i32) -> (i32, i32, i32) {
    %c0_i32 = arith.constant 0 : i32
    %c0_i32_0 = arith.constant 0 : i32
    %c0_i32_1 = arith.constant 0 : i32
    return %arg0, %c0_i32, %c0_i32_0 : i32, i32, i32
  }
  func.func @transform_1(%arg0: i32) -> (i32, i32) {
    %c0_i32 = arith.constant 0 : i32
    %c0_i32_0 = arith.constant 0 : i32
    %c0_i32_1 = arith.constant 0 : i32
    return %c0_i32, %c0_i32_0 : i32, i32
  }
  func.func @transform_2(%arg0: i32) -> (i32, i32) {
    %c0_i32 = arith.constant 0 : i32
    %c0_i32_0 = arith.constant 0 : i32
    %c0_i32_1 = arith.constant 0 : i32
    return %c0_i32, %c0_i32_0 : i32, i32
  }
  func.func @transform_3(%arg0: i32) -> (i32, i32) {
    %c0_i32 = arith.constant 0 : i32
    %c0_i32_0 = arith.constant 0 : i32
    %c0_i32_1 = arith.constant 0 : i32
    return %c0_i32, %c0_i32_0 : i32, i32
  }
  func.func @transform_4(%arg0: i32) -> (i32, i32) {
    %c0_i32 = arith.constant 0 : i32
    %c0_i32_0 = arith.constant 0 : i32
    %c0_i32_1 = arith.constant 0 : i32
    return %c0_i32, %c0_i32_0 : i32, i32
  }
  func.func @transform_5(%arg0: i32) -> (i32, i32) {
    %c0_i32 = arith.constant 0 : i32
    %c0_i32_0 = arith.constant 0 : i32
    %c0_i32_1 = arith.constant 0 : i32
    return %c0_i32, %c0_i32_0 : i32, i32
  }
  func.func @transform_6(%arg0: i32) -> (i32, i32) {
    %c0_i32 = arith.constant 0 : i32
    %c0_i32_0 = arith.constant 0 : i32
    %c0_i32_1 = arith.constant 0 : i32
    return %c0_i32, %c0_i32_0 : i32, i32
  }
  func.func @transform_7(%arg0: i32) -> (i32, i32) {
    %c0_i32 = arith.constant 0 : i32
    %c0_i32_0 = arith.constant 0 : i32
    %c0_i32_1 = arith.constant 0 : i32
    return %c0_i32, %c0_i32_0 : i32, i32
  }
  func.func @transform_8(%arg0: i32) -> (i32, i32) {
    %c0_i32 = arith.constant 0 : i32
    %c0_i32_0 = arith.constant 0 : i32
    %c0_i32_1 = arith.constant 0 : i32
    return %c0_i32, %c0_i32_0 : i32, i32
  }
  func.func @transform_9(%arg0: i32) -> (i32, i32, i32) {
    %c0_i32 = arith.constant 0 : i32
    %c0_i32_0 = arith.constant 0 : i32
    %c0_i32_1 = arith.constant 0 : i32
    return %arg0, %c0_i32, %c0_i32_0 : i32, i32, i32
  }
}

</mosaic_0001>

<llo_original>
// kernel: tpu_custom_call.1
$region0: #{tpu_custom_call.1}
  #allocation0 [shape = 'u32[]', space=smem, size = 0x4, offset = 0x4, fixed_abs, tag = 'smem constant byte address 0x4 - core index']
  #allocation1 [shape = 'u32[72,128]{1,0:T(1,128)}', space=vmem, size = 0x9000, scoped, tag = 'internal scratch']
  #allocation2 [shape = 'f32[32,8]{1,0:T(8,128)}', space=vmem, size = 0x4000, scoped, tag = 'scratch operand']
  %s0 = inlined_call_operand.hbm [shape: f32[2,8,32], index: 0, kind: input, shape index: {}]
  %s1 = inlined_call_operand.vmem [shape: f32[32,96], index: 1, kind: input, shape index: {}]
  %s2 = inlined_call_operand.vmem [shape: f32[1,96], index: 2, kind: input, shape index: {}]
  %s3 = inlined_call_operand.vmem [shape: f32[32,32], index: 3, kind: input, shape index: {}]
  %s4 = inlined_call_operand.vmem [shape: f32[1,32], index: 4, kind: input, shape index: {}]
  %s5 = inlined_call_operand.vmem [shape: f32[32,64], index: 5, kind: input, shape index: {}]
  %s6 = inlined_call_operand.vmem [shape: f32[1,64], index: 6, kind: input, shape index: {}]
  %s7 = inlined_call_operand.vmem [shape: f32[64,32], index: 7, kind: input, shape index: {}]
  %s8 = inlined_call_operand.vmem [shape: f32[1,32], index: 8, kind: input, shape index: {}]
  %s9 = inlined_call_operand.hbm [shape: f32[2,8,32], index: 9, kind: output, shape index: {}]
  %s10 = sld [smem:[#allocation0]]
  $region73: #{tpu_custom_call.1} parent=0
    _
  %s12 = ssub.s32 1, %s10
  %s13 = scalar_select 0, %s12, %s10
  $region1: #{tpu_custom_call.1} parent=0
    #allocation3 [shape = 'u8[8192]{0}', space=vmem, size = 0x2000, scoped, tag = 'input window, operand 0']
    #allocation4 [shape = 's32[2]{0}', space=sflag, size = 0x8, scoped, tag = 'scoped memory for tpu_custom_call.1']
    #allocation5 [shape = 's32[2]{0}', space=sflag, size = 0x8, scoped, tag = 'scoped memory for tpu_custom_call.1']
    #allocation6 [shape = 'u8[8192]{0}', space=vmem, size = 0x2000, scoped, tag = 'output window, operand 0']
    %14 = vsyncpa [#allocation4], 0
    %s15 = scalar_lea.sflag [#allocation4], 1
    %16 = vsyncpa %s15, 0
    %17 = vsyncpa [#allocation5], 0
    %s18 = scalar_lea.sflag [#allocation5], 1
    %19 = vsyncpa %s18, 0
    loop: start=0, step=1, limit=4
    $region2: #{tpu_custom_call.1} parent=1 // loop_pre_header
      _
    $region3: #{tpu_custom_call.1} parent=1 // loop_header
      %s21 = sphi 0, %s25
      %p22 = scmp.ge.s32.totalorder %s21, 4
      %s31 = sphi 0, %s33
      %s34 = sphi 0, %s31
      %s35 = sphi 0, %s34
      %s51 = sphi 0, %s35
      %s55 = sphi 0, %s55
      %s57 = sphi 0, %s55
      %s58 = sphi 0, %s57
      %s72 = sphi 0, %s58
      %s76 = sphi 0, %s76
      %s78 = sphi 0, %s76
      %s79 = sphi 0, %s78
      %s93 = sphi 0, %s79
      %s97 = sphi 0, %s97
      %s99 = sphi 0, %s97
      %s100 = sphi 0, %s99
      %s114 = sphi 0, %s100
      %s118 = sphi 0, %s118
      %s120 = sphi 0, %s118
      %s121 = sphi 0, %s120
      %s135 = sphi 0, %s121
      %s139 = sphi 0, %s139
      %s141 = sphi 0, %s139
      %s142 = sphi 0, %s141
      %s156 = sphi 0, %s142
      %s160 = sphi 0, %s160
      %s162 = sphi 0, %s160
      %s163 = sphi 0, %s162
      %s177 = sphi 0, %s163
      %s181 = sphi 0, %s181
      %s183 = sphi 0, %s181
      %s184 = sphi 0, %s183
      %s198 = sphi 0, %s184
      %s202 = sphi 0, %s202
      %s204 = sphi 0, %s202
      %s205 = sphi 0, %s204
      %s219 = sphi 0, %s205
      %s225 = sphi 0, %s227
      %s228 = sphi 0, %s225
      %s229 = sphi 0, %s228
      %s245 = sphi 0, %s229
    $region4: #{tpu_custom_call.1} parent=1 // loop_header_branch
      %24 = sbr.rel (%p22) target = $region8
    $region5: #{tpu_custom_call.1} parent=1 // loop_body
      %s26 = ssub.s32 %s21, 1
      %s27 = ssub.s32 %s21, 2
      %s28 = sadd.s32 %s21, 1
      %s29 = ssub.s32 %s21, %s28
      %p30 = scmp.eq.s32.totalorder %s29, 0
      %s32 = sadd.s32 %s31, 1
      %s33 = scalar_select %p30, %s31, %s32
      %p36 = pneg %p30
      %p37 = scmp.eq.s32.totalorder %s21, 1
      %p38 = por %p36, %p37
      %p39 = scmp.ne.s32.totalorder %s31, %s34
      %p40 = scmp.eq.s32.totalorder %s21, 0
      %p41 = por %p39, %p40
      %p42 = scmp.ne.s32.totalorder %s31, %s34
      %p43 = scmp.eq.s32.totalorder %s26, 1
      %p44 = por %p42, %p43
      %p45 = scmp.ne.s32.totalorder %s34, %s35
      %p46 = scmp.eq.s32.totalorder %s26, 0
      %p47 = por %p45, %p46
      %p48 = scmp.ne.s32.totalorder %s34, %s35
      %p49 = scmp.eq.s32.totalorder %s27, 1
      %p50 = por %p48, %p49
      %p52 = scmp.ne.s32.totalorder %s35, %s51
      %p53 = scmp.eq.s32.totalorder %s27, 0
      %p54 = por %p52, %p53
      %s56 = sadd.s32 %s55, 1
      %p59 = scmp.eq.s32.totalorder %s21, 1
      %p60 = scmp.ne.s32.totalorder %s55, %s57
      %p61 = scmp.eq.s32.totalorder %s21, 0
      %p62 = por %p60, %p61
      %p63 = scmp.ne.s32.totalorder %s55, %s57
      %p64 = scmp.eq.s32.totalorder %s26, 1
      %p65 = por %p63, %p64
      %p66 = scmp.ne.s32.totalorder %s57, %s58
      %p67 = scmp.eq.s32.totalorder %s26, 0
      %p68 = por %p66, %p67
      %p69 = scmp.ne.s32.totalorder %s57, %s58
      %p70 = scmp.eq.s32.totalorder %s27, 1
      %p71 = por %p69, %p70
      %p73 = scmp.ne.s32.totalorder %s58, %s72
      %p74 = scmp.eq.s32.totalorder %s27, 0
      %p75 = por %p73, %p74
      %s77 = sadd.s32 %s76, 1
      %p80 = scmp.eq.s32.totalorder %s21, 1
      %p81 = scmp.ne.s32.totalorder %s76, %s78
      %p82 = scmp.eq.s32.totalorder %s21, 0
      %p83 = por %p81, %p82
      %p84 = scmp.ne.s32.totalorder %s76, %s78
      %p85 = scmp.eq.s32.totalorder %s26, 1
      %p86 = por %p84, %p85
      %p87 = scmp.ne.s32.totalorder %s78, %s79
      %p88 = scmp.eq.s32.totalorder %s26, 0
      %p89 = por %p87, %p88
      %p90 = scmp.ne.s32.totalorder %s78, %s79
      %p91 = scmp.eq.s32.totalorder %s27, 1
      %p92 = por %p90, %p91
      %p94 = scmp.ne.s32.totalorder %s79, %s93
      %p95 = scmp.eq.s32.totalorder %s27, 0
      %p96 = por %p94, %p95
      %s98 = sadd.s32 %s97, 1
      %p101 = scmp.eq.s32.totalorder %s21, 1
      %p102 = scmp.ne.s32.totalorder %s97, %s99
      %p103 = scmp.eq.s32.totalorder %s21, 0
      %p104 = por %p102, %p103
      %p105 = scmp.ne.s32.totalorder %s97, %s99
      %p106 = scmp.eq.s32.totalorder %s26, 1
      %p107 = por %p105, %p106
      %p108 = scmp.ne.s32.totalorder %s99, %s100
      %p109 = scmp.eq.s32.totalorder %s26, 0
      %p110 = por %p108, %p109
      %p111 = scmp.ne.s32.totalorder %s99, %s100
      %p112 = scmp.eq.s32.totalorder %s27, 1
      %p113 = por %p111, %p112
      %p115 = scmp.ne.s32.totalorder %s100, %s114
      %p116 = scmp.eq.s32.totalorder %s27, 0
      %p117 = por %p115, %p116
      %s119 = sadd.s32 %s118, 1
      %p122 = scmp.eq.s32.totalorder %s21, 1
      %p123 = scmp.ne.s32.totalorder %s118, %s120
      %p124 = scmp.eq.s32.totalorder %s21, 0
      %p125 = por %p123, %p124
      %p126 = scmp.ne.s32.totalorder %s118, %s120
      %p127 = scmp.eq.s32.totalorder %s26, 1
      %p128 = por %p126, %p127
      %p129 = scmp.ne.s32.totalorder %s120, %s121
      %p130 = scmp.eq.s32.totalorder %s26, 0
      %p131 = por %p129, %p130
      %p132 = scmp.ne.s32.totalorder %s120, %s121
      %p133 = scmp.eq.s32.totalorder %s27, 1
      %p134 = por %p132, %p133
      %p136 = scmp.ne.s32.totalorder %s121, %s135
      %p137 = scmp.eq.s32.totalorder %s27, 0
      %p138 = por %p136, %p137
      %s140 = sadd.s32 %s139, 1
      %p143 = scmp.eq.s32.totalorder %s21, 1
      %p144 = scmp.ne.s32.totalorder %s139, %s141
      %p145 = scmp.eq.s32.totalorder %s21, 0
      %p146 = por %p144, %p145
      %p147 = scmp.ne.s32.totalorder %s139, %s141
      %p148 = scmp.eq.s32.totalorder %s26, 1
      %p149 = por %p147, %p148
      %p150 = scmp.ne.s32.totalorder %s141, %s142
      %p151 = scmp.eq.s32.totalorder %s26, 0
      %p152 = por %p150, %p151
      %p153 = scmp.ne.s32.totalorder %s141, %s142
      %p154 = scmp.eq.s32.totalorder %s27, 1
      %p155 = por %p153, %p154
      %p157 = scmp.ne.s32.totalorder %s142, %s156
      %p158 = scmp.eq.s32.totalorder %s27, 0
      %p159 = por %p157, %p158
      %s161 = sadd.s32 %s160, 1
      %p164 = scmp.eq.s32.totalorder %s21, 1
      %p165 = scmp.ne.s32.totalorder %s160, %s162
      %p166 = scmp.eq.s32.totalorder %s21, 0
      %p167 = por %p165, %p166
      %p168 = scmp.ne.s32.totalorder %s160, %s162
      %p169 = scmp.eq.s32.totalorder %s26, 1
      %p170 = por %p168, %p169
      %p171 = scmp.ne.s32.totalorder %s162, %s163
      %p172 = scmp.eq.s32.totalorder %s26, 0
      %p173 = por %p171, %p172
      %p174 = scmp.ne.s32.totalorder %s162, %s163
      %p175 = scmp.eq.s32.totalorder %s27, 1
      %p176 = por %p174, %p175
      %p178 = scmp.ne.s32.totalorder %s163, %s177
      %p179 = scmp.eq.s32.totalorder %s27, 0
      %p180 = por %p178, %p179
      %s182 = sadd.s32 %s181, 1
      %p185 = scmp.eq.s32.totalorder %s21, 1
      %p186 = scmp.ne.s32.totalorder %s181, %s183
      %p187 = scmp.eq.s32.totalorder %s21, 0
      %p188 = por %p186, %p187
      %p189 = scmp.ne.s32.totalorder %s181, %s183
      %p190 = scmp.eq.s32.totalorder %s26, 1
      %p191 = por %p189, %p190
      %p192 = scmp.ne.s32.totalorder %s183, %s184
      %p193 = scmp.eq.s32.totalorder %s26, 0
      %p194 = por %p192, %p193
      %p195 = scmp.ne.s32.totalorder %s183, %s184
      %p196 = scmp.eq.s32.totalorder %s27, 1
      %p197 = por %p195, %p196
      %p199 = scmp.ne.s32.totalorder %s184, %s198
      %p200 = scmp.eq.s32.totalorder %s27, 0
      %p201 = por %p199, %p200
      %s203 = sadd.s32 %s202, 1
      %p206 = scmp.eq.s32.totalorder %s21, 1
      %p207 = scmp.ne.s32.totalorder %s202, %s204
      %p208 = scmp.eq.s32.totalorder %s21, 0
      %p209 = por %p207, %p208
      %p210 = scmp.ne.s32.totalorder %s202, %s204
      %p211 = scmp.eq.s32.totalorder %s26, 1
      %p212 = por %p210, %p211
      %p213 = scmp.ne.s32.totalorder %s204, %s205
      %p214 = scmp.eq.s32.totalorder %s26, 0
      %p215 = por %p213, %p214
      %p216 = scmp.ne.s32.totalorder %s204, %s205
      %p217 = scmp.eq.s32.totalorder %s27, 1
      %p218 = por %p216, %p217
      %p220 = scmp.ne.s32.totalorder %s205, %s219
      %p221 = scmp.eq.s32.totalorder %s27, 0
      %p222 = por %p220, %p221
      %s223 = ssub.s32 %s21, %s28
      %p224 = scmp.eq.s32.totalorder %s223, 0
      %s226 = sadd.s32 %s225, 1
      %s227 = scalar_select %p224, %s225, %s226
      %p230 = pneg %p224
      %p231 = scmp.eq.s32.totalorder %s21, 1
      %p232 = por %p230, %p231
      %p233 = scmp.ne.s32.totalorder %s225, %s228
      %p234 = scmp.eq.s32.totalorder %s21, 0
      %p235 = por %p233, %p234
      %p236 = scmp.ne.s32.totalorder %s225, %s228
      %p237 = scmp.eq.s32.totalorder %s26, 1
      %p238 = por %p236, %p237
      %p239 = scmp.ne.s32.totalorder %s228, %s229
      %p240 = scmp.eq.s32.totalorder %s26, 0
      %p241 = por %p239, %p240
      %p242 = scmp.ne.s32.totalorder %s228, %s229
      %p243 = scmp.eq.s32.totalorder %s27, 1
      %p244 = por %p242, %p243
      %p246 = scmp.ne.s32.totalorder %s229, %s245
      %p247 = scmp.eq.s32.totalorder %s27, 0
      %p248 = por %p246, %p247
      %p249 = scmp.le.s32.totalorder 1, %s21
      %p250 = scmp.lt.s32.totalorder %s21, 3
      %p251 = pnand %p249, %p250
      %p252 = pneg %p251
      // Predicated region
      $region9: #{tpu_custom_call.1} parent=5 // pred_check
        _
      $region10: #{tpu_custom_call.1} parent=5 // pred_check_branch
        %254 = sbr.rel (%p251) target = $region12
      $region11: #{tpu_custom_call.1} parent=5 // pred_region
        %s255 = ssub.s32 %s21, 1
        // Predicated region
        $region13: #{tpu_custom_call.1} parent=11 // pred_check
          %p256 = pneg %p68
        $region14: #{tpu_custom_call.1} parent=11 // pred_check_branch
          %258 = sbr.rel (%p256) target = $region16
        $region15: #{tpu_custom_call.1} parent=11 // pred_region
          _
        $region16: #{tpu_custom_call.1} parent=11 // pred_fallthru
          _
        // Predicated region
        $region17: #{tpu_custom_call.1} parent=11 // pred_check
          %p259 = pneg %p89
        $region18: #{tpu_custom_call.1} parent=11 // pred_check_branch
          %261 = sbr.rel (%p259) target = $region20
        $region19: #{tpu_custom_call.1} parent=11 // pred_region
          _
        $region20: #{tpu_custom_call.1} parent=11 // pred_fallthru
          _
        // Predicated region
        $region21: #{tpu_custom_call.1} parent=11 // pred_check
          %p262 = pneg %p110
        $region22: #{tpu_custom_call.1} parent=11 // pred_check_branch
          %264 = sbr.rel (%p262) target = $region24
        $region23: #{tpu_custom_call.1} parent=11 // pred_region
          _
        $region24: #{tpu_custom_call.1} parent=11 // pred_fallthru
          _
        // Predicated region
        $region25: #{tpu_custom_call.1} parent=11 // pred_check
          %p265 = pneg %p131
        $region26: #{tpu_custom_call.1} parent=11 // pred_check_branch
          %267 = sbr.rel (%p265) target = $region28
        $region27: #{tpu_custom_call.1} parent=11 // pred_region
          _
        $region28: #{tpu_custom_call.1} parent=11 // pred_fallthru
          _
        // Predicated region
        $region29: #{tpu_custom_call.1} parent=11 // pred_check
          %p268 = pneg %p152
        $region30: #{tpu_custom_call.1} parent=11 // pred_check_branch
          %270 = sbr.rel (%p268) target = $region32
        $region31: #{tpu_custom_call.1} parent=11 // pred_region
          _
        $region32: #{tpu_custom_call.1} parent=11 // pred_fallthru
          _
        // Predicated region
        $region33: #{tpu_custom_call.1} parent=11 // pred_check
          %p271 = pneg %p173
        $region34: #{tpu_custom_call.1} parent=11 // pred_check_branch
          %273 = sbr.rel (%p271) target = $region36
        $region35: #{tpu_custom_call.1} parent=11 // pred_region
          _
        $region36: #{tpu_custom_call.1} parent=11 // pred_fallthru
          _
        // Predicated region
        $region37: #{tpu_custom_call.1} parent=11 // pred_check
          %p274 = pneg %p194
        $region38: #{tpu_custom_call.1} parent=11 // pred_check_branch
          %276 = sbr.rel (%p274) target = $region40
        $region39: #{tpu_custom_call.1} parent=11 // pred_region
          _
        $region40: #{tpu_custom_call.1} parent=11 // pred_fallthru
          _
        // Predicated region
        $region41: #{tpu_custom_call.1} parent=11 // pred_check
          %p277 = pneg %p215
        $region42: #{tpu_custom_call.1} parent=11 // pred_check_branch
          %279 = sbr.rel (%p277) target = $region44
        $region43: #{tpu_custom_call.1} parent=11 // pred_region
          _
        $region44: #{tpu_custom_call.1} parent=11 // pred_fallthru
          _
      $region12: #{tpu_custom_call.1} parent=5 // pred_fallthru
        _
      %p280 = scmp.lt.s32.totalorder %s21, 2
      // Predicated region
      $region45: #{tpu_custom_call.1} parent=5 // pred_check
        %p281 = pneg %p280
      $region46: #{tpu_custom_call.1} parent=5 // pred_check_branch
        %283 = sbr.rel (%p281) target = $region48
      $region47: #{tpu_custom_call.1} parent=5 // pred_region
        // Predicated region
        $region49: #{tpu_custom_call.1} parent=47 // pred_check
          %p284 = pneg %p41
        $region50: #{tpu_custom_call.1} parent=47 // pred_check_branch
          %286 = sbr.rel (%p284) target = $region52
        $region51: #{tpu_custom_call.1} parent=47 // pred_region
          %s287 = sand.u32 %s31, 1
          %s288 = scalar_lea.sflag [#allocation4], %s287
          %s289 = sand.u32 %s31, 1
          %s290 = smul.addr %s289, 8
          %s291 = scalar_lea.vmem [#allocation3], %s290
          %293 = vsyncadd %s288, 0
          %s294 = smul.addr %s21, 8
          %s295 = scalar_lea.hbm %s0, %s294
          %s297 = sshll.u32 %s295, 4
          %s298 = int_to_ptr.hbm [resolvable:$true] %s297
          %s299 = sshll.u32 %s291, 4
          %s300 = int_to_ptr.vmem [resolvable:$true] %s299
          %302 = dma.hbm_to_vmem [thread:$0]  %s298, 128, %s300, %s288
        $region52: #{tpu_custom_call.1} parent=47 // pred_fallthru
          _
      $region48: #{tpu_custom_call.1} parent=5 // pred_fallthru
        _
      %p303 = scmp.le.s32.totalorder 1, %s21
      %p304 = scmp.lt.s32.totalorder %s21, 3
      %p305 = pnand %p303, %p304
      %p306 = pneg %p305
      // Predicated region
      $region53: #{tpu_custom_call.1} parent=5 // pred_check
        _
      $region54: #{tpu_custom_call.1} parent=5 // pred_check_branch
        %308 = sbr.rel (%p305) target = $region56
      $region55: #{tpu_custom_call.1} parent=5 // pred_region
        %s309 = ssub.s32 %s21, 1
        %s310 = sand.u32 %s34, 1
        %s311 = scalar_lea.sflag [#allocation4], %s310
        %s312 = sand.u32 %s34, 1
        %s313 = smul.addr %s312, 8
        %s314 = scalar_lea.vmem [#allocation3], %s313
        // Predicated region
        $region57: #{tpu_custom_call.1} parent=55 // pred_check
          %p315 = pneg %p47
        $region58: #{tpu_custom_call.1} parent=55 // pred_check_branch
          %317 = sbr.rel (%p315) target = $region60
        $region59: #{tpu_custom_call.1} parent=55 // pred_region
          %319 = dma.done %s311, 128
        $region60: #{tpu_custom_call.1} parent=55 // pred_fallthru
          _
        %s320 = sand.u32 %s34, 1
        %s321 = scalar_lea.sflag [#allocation4], %s320
        %s322 = sand.u32 %s34, 1
        %s323 = smul.addr %s322, 8
        %s324 = scalar_lea.vmem [#allocation3], %s323
        %p325 = pneg %p47
        %p326 = pneg %p44
        %p327 = pneg %p68
        %p328 = pneg %p65
        %p329 = pneg %p89
        %p330 = pneg %p86
        %p331 = pneg %p110
        %p332 = pneg %p107
        %p333 = pneg %p131
        %p334 = pneg %p128
        %p335 = pneg %p152
        %p336 = pneg %p149
        %p337 = pneg %p173
        %p338 = pneg %p170
        %p339 = pneg %p194
        %p340 = pneg %p191
        %p341 = pneg %p215
        %p342 = pneg %p212
        %p343 = pneg %p241
        %p344 = pneg %p238
        %s345 = sand.u32 %s228, 1
        %s346 = scalar_lea.sflag [#allocation5], %s345
        %s347 = sand.u32 %s228, 1
        %s348 = smul.addr %s347, 8
        %s349 = scalar_lea.vmem [#allocation6], %s348
        %v350 = vld [vmem:[%s314] sm:$0xff]
        %v351 = vld [vmem:[%s1] sm:$0xff]
        %v352 = vld [vmem:[%s1 + $0x8] sm:$0xff]
        %v353 = vld [vmem:[%s1 + $0x10] sm:$0xff]
        %v354 = vld [vmem:[%s1 + $0x18] sm:$0xff]
        %v355 = vld [vmem:[%s2] sm:$0x1]
        %v357 = vperm.slane %v355, 0
        %vm359 = vcmask 261120
        %v361 = vsel %vm359, %v350, 0
        %363 = vmatpush.msra.mxu0 0.0
        %364 = vmatpush.msra.mxu0 0.0
        %365 = vmatpush.msra.mxu0 0.0
        %366 = vmatpush.msra.mxu0 0.0
        %367 = vmatpush.msra.mxu0 0.0
        %368 = vmatpush.msra.mxu0 0.0
        %369 = vmatpush.msra.mxu0 0.0
        %370 = vmatpush.msra.mxu0 0.0
        %371 = vmatpush.msra.mxu0 0.0
        %372 = vmatpush.msra.mxu0 0.0
        %373 = vmatpush.msra.mxu0 0.0
        %374 = vmatpush.msra.mxu0 0.0
        %375 = vmatpush.msra.mxu0 %v354
        %376 = vmatpush.msra.mxu0 %v353
        %377 = vmatpush.msra.mxu0 %v352
        %378 = vmatpush.msra.mxu0 %v351
        %379 = vmatmul.f32.gmra.mxu0 %v361
        %v380 = vpop.f32.mrf.mxu0
        %v381 = vadd.f32 %v357, %v380
        %382 = vdwg.mxu0
        %384 = vrot.lane.b32.xlu0 %v381, 96
        %v385 = vpop.permute.xlu0 %384
        %vm386 = vcmask 64512
        %v387 = vsel %vm386, %v381, 0
        %v389 = vsel %vm386, %v385, 0
        %391 = vmatpush.xpose.msra.mxu0 0.0
        %392 = vmatpush.xpose.msra.mxu0 0.0
        %393 = vmatpush.xpose.msra.mxu0 0.0
        %394 = vmatpush.xpose.msra.mxu0 0.0
        %395 = vmatpush.xpose.msra.mxu0 0.0
        %396 = vmatpush.xpose.msra.mxu0 0.0
        %397 = vmatpush.xpose.msra.mxu0 0.0
        %398 = vmatpush.xpose.msra.mxu0 0.0
        %399 = vmatpush.xpose.msra.mxu0 0.0
        %400 = vmatpush.xpose.msra.mxu0 0.0
        %401 = vmatpush.xpose.msra.mxu0 0.0
        %402 = vmatpush.xpose.msra.mxu0 0.0
        %403 = vmatpush.xpose.msra.mxu0 0.0
        %404 = vmatpush.xpose.msra.mxu0 0.0
        %405 = vmatpush.xpose.msra.mxu0 0.0
        %406 = vmatpush.xpose.msra.mxu0 %v389
        %407 = vmatmul.f32.gmra.mxu0 %v387
        %v408 = vpop.f32.mrf.mxu0
        %v409 = vadd.f32 0.0, %v408
        %410 = vdwg.mxu0
        %v411 = vsel %vm386, %v409, -inf
        %412 = vmax.xlane.f32.xlu0 %v411
        %v413 = vpop.xlane.xlu0 %412
        %v414 = vsub.f32 %v409, %v413
        %v415 = vmul.f32 %v414, 1.442695
        %v416 = vpow.pop %v415
        %v417 = vsel %vm386, %v416, 0.0
        %418 = vadd.xlane.f32.xlu0 %v417
        %v419 = vpop.xlane.xlu0 %418
        %v420 = vrcp.pop %v419
        %v421 = vmul.f32 %v419, %v420
        %v422 = vsub.f32 1.0, %v421
        %v423 = vmul.f32 %v420, %v422
        %v424 = vadd.f32 %v420, %v423
        %vm425 = vweird.f32 %v419
        %vm426 = vweird.f32 %v420
        %vm427 = vmor %vm425, %vm426
        %v428 = vsel %vm427, %v420, %v424
        %v429 = vand.u32 2147483647, %v419
        %vm430 = vcmp.eq.f32.partialorder %v429, 8.507059e+37
        %v431 = vand.u32 %v419, 2147483648
        %v432 = vor.u32 1.1754944e-38, %v431
        %v433 = vsel %vm430, %v432, %v428
        %v434 = vmul.f32 %v416, %v433
        %435 = vrot.lane.b32.xlu0 %v381, 64
        %v436 = vpop.permute.xlu0 %435
        %438 = vxpose.xlu0.b32.start [1/16] %v436, 128
        %439 = vxpose.xlu0.b32.cont [2/16] 0.0, 128
        %440 = vxpose.xlu0.b32.cont [3/16] 0.0, 128
        %441 = vxpose.xlu0.b32.cont [4/16] 0.0, 128
        %442 = vxpose.xlu0.b32.cont [5/16] 0.0, 128
        %443 = vxpose.xlu0.b32.cont [6/16] 0.0, 128
        %444 = vxpose.xlu0.b32.cont [7/16] 0.0, 128
        %445 = vxpose.xlu0.b32.cont [8/16] 0.0, 128
        %446 = vxpose.xlu0.b32.cont [9/16] 0.0, 128
        %447 = vxpose.xlu0.b32.cont [10/16] 0.0, 128
        %448 = vxpose.xlu0.b32.cont [11/16] 0.0, 128
        %449 = vxpose.xlu0.b32.cont [12/16] 0.0, 128
        %450 = vxpose.xlu0.b32.cont [13/16] 0.0, 128
        %451 = vxpose.xlu0.b32.cont [14/16] 0.0, 128
        %452 = vxpose.xlu0.b32.cont [15/16] 0.0, 128
        %453 = vxpose.xlu0.b32.end [16/16] 0.0, 128
        %v454 = vpop.trf.xlu0
        %v455 = vpop.trf.xlu0
        %v456 = vpop.trf.xlu0
        %v457 = vpop.trf.xlu0
        %v458 = vpop.trf.xlu0
        %v459 = vpop.trf.xlu0
        %v460 = vpop.trf.xlu0
        %v461 = vpop.trf.xlu0
        %v462 = vpop.trf.xlu0
        %v463 = vpop.trf.xlu0
        %v464 = vpop.trf.xlu0
        %v465 = vpop.trf.xlu0
        %v466 = vpop.trf.xlu0
        %v467 = vpop.trf.xlu0
        %v468 = vpop.trf.xlu0
        %v469 = vpop.trf.xlu0
        %v471 = vsel %vm386, %v454, 0
        %v474 = vsel %vm386, %v434, 0
        %476 = vmatpush.xpose.msra.mxu0 0.0
        %477 = vmatpush.xpose.msra.mxu0 0.0
        %478 = vmatpush.xpose.msra.mxu0 0.0
        %479 = vmatpush.xpose.msra.mxu0 0.0
        %480 = vmatpush.xpose.msra.mxu0 0.0
        %481 = vmatpush.xpose.msra.mxu0 0.0
        %482 = vmatpush.xpose.msra.mxu0 0.0
        %483 = vmatpush.xpose.msra.mxu0 0.0
        %484 = vmatpush.xpose.msra.mxu0 0.0
        %485 = vmatpush.xpose.msra.mxu0 0.0
        %486 = vmatpush.xpose.msra.mxu0 0.0
        %487 = vmatpush.xpose.msra.mxu0 0.0
        %488 = vmatpush.xpose.msra.mxu0 0.0
        %489 = vmatpush.xpose.msra.mxu0 0.0
        %490 = vmatpush.xpose.msra.mxu0 0.0
        %491 = vmatpush.xpose.msra.mxu0 %v474
        %492 = vmatmul.f32.gmra.mxu0 %v471
        %v493 = vpop.f32.mrf.mxu0
        %v494 = vadd.f32 0.0, %v493
        %495 = vdwg.mxu0
        %496 = vst.msk [vmem:[#allocation2] sm:$0xff] %vm386, %v494
        %497 = vrot.lane.b32.xlu0 %v381, 120
        %v498 = vpop.permute.xlu0 %497
        %499 = vrot.lane.b32.xlu0 %v381, 88
        %v500 = vpop.permute.xlu0 %499
        %v501 = vsel %vm386, %v498, 0
        %v503 = vsel %vm386, %v500, 0
        %505 = vmatpush.xpose.msra.mxu0 0.0
        %506 = vmatpush.xpose.msra.mxu0 0.0
        %507 = vmatpush.xpose.msra.mxu0 0.0
        %508 = vmatpush.xpose.msra.mxu0 0.0
        %509 = vmatpush.xpose.msra.mxu0 0.0
        %510 = vmatpush.xpose.msra.mxu0 0.0
        %511 = vmatpush.xpose.msra.mxu0 0.0
        %512 = vmatpush.xpose.msra.mxu0 0.0
        %513 = vmatpush.xpose.msra.mxu0 0.0
        %514 = vmatpush.xpose.msra.mxu0 0.0
        %515 = vmatpush.xpose.msra.mxu0 0.0
        %516 = vmatpush.xpose.msra.mxu0 0.0
        %517 = vmatpush.xpose.msra.mxu0 0.0
        %518 = vmatpush.xpose.msra.mxu0 0.0
        %519 = vmatpush.xpose.msra.mxu0 0.0
        %520 = vmatpush.xpose.msra.mxu0 %v503
        %521 = vmatmul.f32.gmra.mxu0 %v501
        %v522 = vpop.f32.mrf.mxu0
        %v523 = vadd.f32 0.0, %v522
        %524 = vdwg.mxu0
        %v525 = vsel %vm386, %v523, -inf
        %526 = vmax.xlane.f32.xlu0 %v525
        %v527 = vpop.xlane.xlu0 %526
        %v528 = vsub.f32 %v523, %v527
        %v529 = vmul.f32 %v528, 1.442695
        %v530 = vpow.pop %v529
        %v531 = vsel %vm386, %v530, 0.0
        %532 = vadd.xlane.f32.xlu0 %v531
        %v533 = vpop.xlane.xlu0 %532
        %v534 = vrcp.pop %v533
        %v535 = vmul.f32 %v533, %v534
        %v536 = vsub.f32 1.0, %v535
        %v537 = vmul.f32 %v534, %v536
        %v538 = vadd.f32 %v534, %v537
        %vm539 = vweird.f32 %v533
        %vm540 = vweird.f32 %v534
        %vm541 = vmor %vm539, %vm540
        %v542 = vsel %vm541, %v534, %v538
        %v543 = vand.u32 2147483647, %v533
        %vm544 = vcmp.eq.f32.partialorder %v543, 8.507059e+37
        %v545 = vand.u32 %v533, 2147483648
        %v546 = vor.u32 1.1754944e-38, %v545
        %v547 = vsel %vm544, %v546, %v542
        %v548 = vmul.f32 %v530, %v547
        %549 = vrot.lane.b32.xlu0 %v381, 56
        %v550 = vpop.permute.xlu0 %549
        %552 = vxpose.xlu0.b32.start [1/16] %v550, 128
        %553 = vxpose.xlu0.b32.cont [2/16] 0.0, 128
        %554 = vxpose.xlu0.b32.cont [3/16] 0.0, 128
        %555 = vxpose.xlu0.b32.cont [4/16] 0.0, 128
        %556 = vxpose.xlu0.b32.cont [5/16] 0.0, 128
        %557 = vxpose.xlu0.b32.cont [6/16] 0.0, 128
        %558 = vxpose.xlu0.b32.cont [7/16] 0.0, 128
        %559 = vxpose.xlu0.b32.cont [8/16] 0.0, 128
        %560 = vxpose.xlu0.b32.cont [9/16] 0.0, 128
        %561 = vxpose.xlu0.b32.cont [10/16] 0.0, 128
        %562 = vxpose.xlu0.b32.cont [11/16] 0.0, 128
        %563 = vxpose.xlu0.b32.cont [12/16] 0.0, 128
        %564 = vxpose.xlu0.b32.cont [13/16] 0.0, 128
        %565 = vxpose.xlu0.b32.cont [14/16] 0.0, 128
        %566 = vxpose.xlu0.b32.cont [15/16] 0.0, 128
        %567 = vxpose.xlu0.b32.end [16/16] 0.0, 128
        %v568 = vpop.trf.xlu0
        %v569 = vpop.trf.xlu0
        %v570 = vpop.trf.xlu0
        %v571 = vpop.trf.xlu0
        %v572 = vpop.trf.xlu0
        %v573 = vpop.trf.xlu0
        %v574 = vpop.trf.xlu0
        %v575 = vpop.trf.xlu0
        %v576 = vpop.trf.xlu0
        %v577 = vpop.trf.xlu0
        %v578 = vpop.trf.xlu0
        %v579 = vpop.trf.xlu0
        %v580 = vpop.trf.xlu0
        %v581 = vpop.trf.xlu0
        %v582 = vpop.trf.xlu0
        %v583 = vpop.trf.xlu0
        %v585 = vsel %vm386, %v568, 0
        %v588 = vsel %vm386, %v548, 0
        %590 = vmatpush.xpose.msra.mxu0 0.0
        %591 = vmatpush.xpose.msra.mxu0 0.0
        %592 = vmatpush.xpose.msra.mxu0 0.0
        %593 = vmatpush.xpose.msra.mxu0 0.0
        %594 = vmatpush.xpose.msra.mxu0 0.0
        %595 = vmatpush.xpose.msra.mxu0 0.0
        %596 = vmatpush.xpose.msra.mxu0 0.0
        %597 = vmatpush.xpose.msra.mxu0 0.0
        %598 = vmatpush.xpose.msra.mxu0 0.0
        %599 = vmatpush.xpose.msra.mxu0 0.0
        %600 = vmatpush.xpose.msra.mxu0 0.0
        %601 = vmatpush.xpose.msra.mxu0 0.0
        %602 = vmatpush.xpose.msra.mxu0 0.0
        %603 = vmatpush.xpose.msra.mxu0 0.0
        %604 = vmatpush.xpose.msra.mxu0 0.0
        %605 = vmatpush.xpose.msra.mxu0 %v588
        %606 = vmatmul.f32.gmra.mxu0 %v585
        %v607 = vpop.f32.mrf.mxu0
        %v608 = vadd.f32 0.0, %v607
        %609 = vdwg.mxu0
        %610 = vst.msk [vmem:[#allocation2 + $0x8] sm:$0xff] %vm386, %v608
        %611 = vrot.lane.b32.xlu0 %v381, 112
        %v612 = vpop.permute.xlu0 %611
        %613 = vrot.lane.b32.xlu0 %v381, 80
        %v614 = vpop.permute.xlu0 %613
        %v615 = vsel %vm386, %v612, 0
        %v617 = vsel %vm386, %v614, 0
        %619 = vmatpush.xpose.msra.mxu0 0.0
        %620 = vmatpush.xpose.msra.mxu0 0.0
        %621 = vmatpush.xpose.msra.mxu0 0.0
        %622 = vmatpush.xpose.msra.mxu0 0.0
        %623 = vmatpush.xpose.msra.mxu0 0.0
        %624 = vmatpush.xpose.msra.mxu0 0.0
        %625 = vmatpush.xpose.msra.mxu0 0.0
        %626 = vmatpush.xpose.msra.mxu0 0.0
        %627 = vmatpush.xpose.msra.mxu0 0.0
        %628 = vmatpush.xpose.msra.mxu0 0.0
        %629 = vmatpush.xpose.msra.mxu0 0.0
        %630 = vmatpush.xpose.msra.mxu0 0.0
        %631 = vmatpush.xpose.msra.mxu0 0.0
        %632 = vmatpush.xpose.msra.mxu0 0.0
        %633 = vmatpush.xpose.msra.mxu0 0.0
        %634 = vmatpush.xpose.msra.mxu0 %v617
        %635 = vmatmul.f32.gmra.mxu0 %v615
        %v636 = vpop.f32.mrf.mxu0
        %v637 = vadd.f32 0.0, %v636
        %638 = vdwg.mxu0
        %v639 = vsel %vm386, %v637, -inf
        %640 = vmax.xlane.f32.xlu0 %v639
        %v641 = vpop.xlane.xlu0 %640
        %v642 = vsub.f32 %v637, %v641
        %v643 = vmul.f32 %v642, 1.442695
        %v644 = vpow.pop %v643
        %v645 = vsel %vm386, %v644, 0.0
        %646 = vadd.xlane.f32.xlu0 %v645
        %v647 = vpop.xlane.xlu0 %646
        %v648 = vrcp.pop %v647
        %v649 = vmul.f32 %v647, %v648
        %v650 = vsub.f32 1.0, %v649
        %v651 = vmul.f32 %v648, %v650
        %v652 = vadd.f32 %v648, %v651
        %vm653 = vweird.f32 %v647
        %vm654 = vweird.f32 %v648
        %vm655 = vmor %vm653, %vm654
        %v656 = vsel %vm655, %v648, %v652
        %v657 = vand.u32 2147483647, %v647
        %vm658 = vcmp.eq.f32.partialorder %v657, 8.507059e+37
        %v659 = vand.u32 %v647, 2147483648
        %v660 = vor.u32 1.1754944e-38, %v659
        %v661 = vsel %vm658, %v660, %v656
        %v662 = vmul.f32 %v644, %v661
        %663 = vrot.lane.b32.xlu0 %v381, 48
        %v664 = vpop.permute.xlu0 %663
        %666 = vxpose.xlu0.b32.start [1/16] %v664, 128
        %667 = vxpose.xlu0.b32.cont [2/16] 0.0, 128
        %668 = vxpose.xlu0.b32.cont [3/16] 0.0, 128
        %669 = vxpose.xlu0.b32.cont [4/16] 0.0, 128
        %670 = vxpose.xlu0.b32.cont [5/16] 0.0, 128
        %671 = vxpose.xlu0.b32.cont [6/16] 0.0, 128
        %672 = vxpose.xlu0.b32.cont [7/16] 0.0, 128
        %673 = vxpose.xlu0.b32.cont [8/16] 0.0, 128
        %674 = vxpose.xlu0.b32.cont [9/16] 0.0, 128
        %675 = vxpose.xlu0.b32.cont [10/16] 0.0, 128
        %676 = vxpose.xlu0.b32.cont [11/16] 0.0, 128
        %677 = vxpose.xlu0.b32.cont [12/16] 0.0, 128
        %678 = vxpose.xlu0.b32.cont [13/16] 0.0, 128
        %679 = vxpose.xlu0.b32.cont [14/16] 0.0, 128
        %680 = vxpose.xlu0.b32.cont [15/16] 0.0, 128
        %681 = vxpose.xlu0.b32.end [16/16] 0.0, 128
        %v682 = vpop.trf.xlu0
        %v683 = vpop.trf.xlu0
        %v684 = vpop.trf.xlu0
        %v685 = vpop.trf.xlu0
        %v686 = vpop.trf.xlu0
        %v687 = vpop.trf.xlu0
        %v688 = vpop.trf.xlu0
        %v689 = vpop.trf.xlu0
        %v690 = vpop.trf.xlu0
        %v691 = vpop.trf.xlu0
        %v692 = vpop.trf.xlu0
        %v693 = vpop.trf.xlu0
        %v694 = vpop.trf.xlu0
        %v695 = vpop.trf.xlu0
        %v696 = vpop.trf.xlu0
        %v697 = vpop.trf.xlu0
        %v699 = vsel %vm386, %v682, 0
        %v702 = vsel %vm386, %v662, 0
        %704 = vmatpush.xpose.msra.mxu0 0.0
        %705 = vmatpush.xpose.msra.mxu0 0.0
        %706 = vmatpush.xpose.msra.mxu0 0.0
        %707 = vmatpush.xpose.msra.mxu0 0.0
        %708 = vmatpush.xpose.msra.mxu0 0.0
        %709 = vmatpush.xpose.msra.mxu0 0.0
        %710 = vmatpush.xpose.msra.mxu0 0.0
        %711 = vmatpush.xpose.msra.mxu0 0.0
        %712 = vmatpush.xpose.msra.mxu0 0.0
        %713 = vmatpush.xpose.msra.mxu0 0.0
        %714 = vmatpush.xpose.msra.mxu0 0.0
        %715 = vmatpush.xpose.msra.mxu0 0.0
        %716 = vmatpush.xpose.msra.mxu0 0.0
        %717 = vmatpush.xpose.msra.mxu0 0.0
        %718 = vmatpush.xpose.msra.mxu0 0.0
        %719 = vmatpush.xpose.msra.mxu0 %v702
        %720 = vmatmul.f32.gmra.mxu0 %v699
        %v721 = vpop.f32.mrf.mxu0
        %v722 = vadd.f32 0.0, %v721
        %723 = vdwg.mxu0
        %724 = vst.msk [vmem:[#allocation2 + $0x10] sm:$0xff] %vm386, %v722
        %725 = vrot.lane.b32.xlu0 %v381, 104
        %v726 = vpop.permute.xlu0 %725
        %727 = vrot.lane.b32.xlu0 %v381, 72
        %v728 = vpop.permute.xlu0 %727
        %v729 = vsel %vm386, %v726, 0
        %v731 = vsel %vm386, %v728, 0
        %733 = vmatpush.xpose.msra.mxu0 0.0
        %734 = vmatpush.xpose.msra.mxu0 0.0
        %735 = vmatpush.xpose.msra.mxu0 0.0
        %736 = vmatpush.xpose.msra.mxu0 0.0
        %737 = vmatpush.xpose.msra.mxu0 0.0
        %738 = vmatpush.xpose.msra.mxu0 0.0
        %739 = vmatpush.xpose.msra.mxu0 0.0
        %740 = vmatpush.xpose.msra.mxu0 0.0
        %741 = vmatpush.xpose.msra.mxu0 0.0
        %742 = vmatpush.xpose.msra.mxu0 0.0
        %743 = vmatpush.xpose.msra.mxu0 0.0
        %744 = vmatpush.xpose.msra.mxu0 0.0
        %745 = vmatpush.xpose.msra.mxu0 0.0
        %746 = vmatpush.xpose.msra.mxu0 0.0
        %747 = vmatpush.xpose.msra.mxu0 0.0
        %748 = vmatpush.xpose.msra.mxu0 %v731
        %749 = vmatmul.f32.gmra.mxu0 %v729
        %v750 = vpop.f32.mrf.mxu0
        %v751 = vadd.f32 0.0, %v750
        %752 = vdwg.mxu0
        %v753 = vsel %vm386, %v751, -inf
        %754 = vmax.xlane.f32.xlu0 %v753
        %v755 = vpop.xlane.xlu0 %754
        %v756 = vsub.f32 %v751, %v755
        %v757 = vmul.f32 %v756, 1.442695
        %v758 = vpow.pop %v757
        %v759 = vsel %vm386, %v758, 0.0
        %760 = vadd.xlane.f32.xlu0 %v759
        %v761 = vpop.xlane.xlu0 %760
        %v762 = vrcp.pop %v761
        %v763 = vmul.f32 %v761, %v762
        %v764 = vsub.f32 1.0, %v763
        %v765 = vmul.f32 %v762, %v764
        %v766 = vadd.f32 %v762, %v765
        %vm767 = vweird.f32 %v761
        %vm768 = vweird.f32 %v762
        %vm769 = vmor %vm767, %vm768
        %v770 = vsel %vm769, %v762, %v766
        %v771 = vand.u32 2147483647, %v761
        %vm772 = vcmp.eq.f32.partialorder %v771, 8.507059e+37
        %v773 = vand.u32 %v761, 2147483648
        %v774 = vor.u32 1.1754944e-38, %v773
        %v775 = vsel %vm772, %v774, %v770
        %v776 = vmul.f32 %v758, %v775
        %777 = vrot.lane.b32.xlu0 %v381, 40
        %v778 = vpop.permute.xlu0 %777
        %780 = vxpose.xlu0.b32.start [1/16] %v778, 128
        %781 = vxpose.xlu0.b32.cont [2/16] 0.0, 128
        %782 = vxpose.xlu0.b32.cont [3/16] 0.0, 128
        %783 = vxpose.xlu0.b32.cont [4/16] 0.0, 128
        %784 = vxpose.xlu0.b32.cont [5/16] 0.0, 128
        %785 = vxpose.xlu0.b32.cont [6/16] 0.0, 128
        %786 = vxpose.xlu0.b32.cont [7/16] 0.0, 128
        %787 = vxpose.xlu0.b32.cont [8/16] 0.0, 128
        %788 = vxpose.xlu0.b32.cont [9/16] 0.0, 128
        %789 = vxpose.xlu0.b32.cont [10/16] 0.0, 128
        %790 = vxpose.xlu0.b32.cont [11/16] 0.0, 128
        %791 = vxpose.xlu0.b32.cont [12/16] 0.0, 128
        %792 = vxpose.xlu0.b32.cont [13/16] 0.0, 128
        %793 = vxpose.xlu0.b32.cont [14/16] 0.0, 128
        %794 = vxpose.xlu0.b32.cont [15/16] 0.0, 128
        %795 = vxpose.xlu0.b32.end [16/16] 0.0, 128
        %v796 = vpop.trf.xlu0
        %v797 = vpop.trf.xlu0
        %v798 = vpop.trf.xlu0
        %v799 = vpop.trf.xlu0
        %v800 = vpop.trf.xlu0
        %v801 = vpop.trf.xlu0
        %v802 = vpop.trf.xlu0
        %v803 = vpop.trf.xlu0
        %v804 = vpop.trf.xlu0
        %v805 = vpop.trf.xlu0
        %v806 = vpop.trf.xlu0
        %v807 = vpop.trf.xlu0
        %v808 = vpop.trf.xlu0
        %v809 = vpop.trf.xlu0
        %v810 = vpop.trf.xlu0
        %v811 = vpop.trf.xlu0
        %v813 = vsel %vm386, %v796, 0
        %v816 = vsel %vm386, %v776, 0
        %818 = vmatpush.xpose.msra.mxu0 0.0
        %819 = vmatpush.xpose.msra.mxu0 0.0
        %820 = vmatpush.xpose.msra.mxu0 0.0
        %821 = vmatpush.xpose.msra.mxu0 0.0
        %822 = vmatpush.xpose.msra.mxu0 0.0
        %823 = vmatpush.xpose.msra.mxu0 0.0
        %824 = vmatpush.xpose.msra.mxu0 0.0
        %825 = vmatpush.xpose.msra.mxu0 0.0
        %826 = vmatpush.xpose.msra.mxu0 0.0
        %827 = vmatpush.xpose.msra.mxu0 0.0
        %828 = vmatpush.xpose.msra.mxu0 0.0
        %829 = vmatpush.xpose.msra.mxu0 0.0
        %830 = vmatpush.xpose.msra.mxu0 0.0
        %831 = vmatpush.xpose.msra.mxu0 0.0
        %832 = vmatpush.xpose.msra.mxu0 0.0
        %833 = vmatpush.xpose.msra.mxu0 %v816
        %834 = vmatmul.f32.gmra.mxu0 %v813
        %v835 = vpop.f32.mrf.mxu0
        %v836 = vadd.f32 0.0, %v835
        %837 = vdwg.mxu0
        %838 = vst.msk [vmem:[#allocation2 + $0x18] sm:$0xff] %vm386, %v836
        %v839 = vld [vmem:[%s4] sm:$0x1]
        %v840 = vld [vmem:[#allocation2] ss:$4 sm:$0xff]
        %v841 = vld [vmem:[%s3] sm:$0xff]
        %v843 = vsel %vm386, %v840, 0
        %845 = vmatpush.msra.mxu0 0.0
        %846 = vmatpush.msra.mxu0 0.0
        %847 = vmatpush.msra.mxu0 0.0
        %848 = vmatpush.msra.mxu0 0.0
        %849 = vmatpush.msra.mxu0 0.0
        %850 = vmatpush.msra.mxu0 0.0
        %851 = vmatpush.msra.mxu0 0.0
        %852 = vmatpush.msra.mxu0 0.0
        %853 = vmatpush.msra.mxu0 0.0
        %854 = vmatpush.msra.mxu0 0.0
        %855 = vmatpush.msra.mxu0 0.0
        %856 = vmatpush.msra.mxu0 0.0
        %857 = vmatpush.msra.mxu0 0.0
        %858 = vmatpush.msra.mxu0 0.0
        %859 = vmatpush.msra.mxu0 0.0
        %860 = vmatpush.msra.mxu0 %v841
        %861 = vmatmul.f32.gmra.mxu0 %v843
        %v862 = vpop.f32.mrf.mxu0
        %v863 = vadd.f32 0.0, %v862
        %864 = vdwg.mxu0
        %v866 = vperm.slane %v839, 0
        %v868 = vadd.f32 %v866, %v863
        %s869 = scalar_lea.vmem [#allocation2], 1
        %v870 = vld [vmem:[%s869] ss:$4 sm:$0xff]
        %v871 = vld [vmem:[%s3 + $0x8] sm:$0xff]
        %v873 = vsel %vm386, %v870, 0
        %875 = vmatpush.msra.mxu0 0.0
        %876 = vmatpush.msra.mxu0 0.0
        %877 = vmatpush.msra.mxu0 0.0
        %878 = vmatpush.msra.mxu0 0.0
        %879 = vmatpush.msra.mxu0 0.0
        %880 = vmatpush.msra.mxu0 0.0
        %881 = vmatpush.msra.mxu0 0.0
        %882 = vmatpush.msra.mxu0 0.0
        %883 = vmatpush.msra.mxu0 0.0
        %884 = vmatpush.msra.mxu0 0.0
        %885 = vmatpush.msra.mxu0 0.0
        %886 = vmatpush.msra.mxu0 0.0
        %887 = vmatpush.msra.mxu0 0.0
        %888 = vmatpush.msra.mxu0 0.0
        %889 = vmatpush.msra.mxu0 0.0
        %890 = vmatpush.msra.mxu0 %v871
        %891 = vmatmul.f32.gmra.mxu0 %v873
        %v892 = vpop.f32.mrf.mxu0
        %v893 = vadd.f32 0.0, %v892
        %894 = vdwg.mxu0
        %v895 = vadd.f32 %v868, %v893
        %s896 = scalar_lea.vmem [#allocation2], 2
        %v897 = vld [vmem:[%s896] ss:$4 sm:$0xff]
        %v898 = vld [vmem:[%s3 + $0x10] sm:$0xff]
        %v900 = vsel %vm386, %v897, 0
        %902 = vmatpush.msra.mxu0 0.0
        %903 = vmatpush.msra.mxu0 0.0
        %904 = vmatpush.msra.mxu0 0.0
        %905 = vmatpush.msra.mxu0 0.0
        %906 = vmatpush.msra.mxu0 0.0
        %907 = vmatpush.msra.mxu0 0.0
        %908 = vmatpush.msra.mxu0 0.0
        %909 = vmatpush.msra.mxu0 0.0
        %910 = vmatpush.msra.mxu0 0.0
        %911 = vmatpush.msra.mxu0 0.0
        %912 = vmatpush.msra.mxu0 0.0
        %913 = vmatpush.msra.mxu0 0.0
        %914 = vmatpush.msra.mxu0 0.0
        %915 = vmatpush.msra.mxu0 0.0
        %916 = vmatpush.msra.mxu0 0.0
        %917 = vmatpush.msra.mxu0 %v898
        %918 = vmatmul.f32.gmra.mxu0 %v900
        %v919 = vpop.f32.mrf.mxu0
        %v920 = vadd.f32 0.0, %v919
        %921 = vdwg.mxu0
        %v922 = vadd.f32 %v895, %v920
        %s923 = scalar_lea.vmem [#allocation2], 3
        %v924 = vld [vmem:[%s923] ss:$4 sm:$0xff]
        %v925 = vld [vmem:[%s3 + $0x18] sm:$0xff]
        %v927 = vsel %vm386, %v924, 0
        %929 = vmatpush.msra.mxu0 0.0
        %930 = vmatpush.msra.mxu0 0.0
        %931 = vmatpush.msra.mxu0 0.0
        %932 = vmatpush.msra.mxu0 0.0
        %933 = vmatpush.msra.mxu0 0.0
        %934 = vmatpush.msra.mxu0 0.0
        %935 = vmatpush.msra.mxu0 0.0
        %936 = vmatpush.msra.mxu0 0.0
        %937 = vmatpush.msra.mxu0 0.0
        %938 = vmatpush.msra.mxu0 0.0
        %939 = vmatpush.msra.mxu0 0.0
        %940 = vmatpush.msra.mxu0 0.0
        %941 = vmatpush.msra.mxu0 0.0
        %942 = vmatpush.msra.mxu0 0.0
        %943 = vmatpush.msra.mxu0 0.0
        %944 = vmatpush.msra.mxu0 %v925
        %945 = vmatmul.f32.gmra.mxu0 %v927
        %v946 = vpop.f32.mrf.mxu0
        %v947 = vadd.f32 0.0, %v946
        %948 = vdwg.mxu0
        %v949 = vadd.f32 %v922, %v947
        %v950 = vadd.f32 %v949, %v350
        %v951 = vsel %vm359, %v950, 0.0
        %952 = vadd.xlane.f32.xlu0 %v951
        %v953 = vpop.xlane.xlu0 %952
        %v954 = vrot.slane %v953, 4
        %v955 = vadd.f32 %v953, %v954
        %v956 = vrot.slane %v955, 2
        %v957 = vadd.f32 %v955, %v956
        %v958 = vrot.slane %v957, 1
        %v959 = vadd.f32 %v957, %v958
        %s960 = vtos %v959
        %v961 = vrcp.pop 256.0
        %v962 = vmul.f32 256.0, %v961
        %v963 = vsub.f32 1.0, %v962
        %v964 = vmul.f32 %v961, %v963
        %v965 = vadd.f32 %v961, %v964
        %vm966 = vweird.f32 %v961
        %v967 = vsel %vm966, %v961, %v965
        %s968 = vtos %v967
        %s969 = smul.f32 %s960, %s968
        %v970 = vstv %s969
        %v971 = vsub.f32 %v950, %v970
        %v972 = vmul.f32 %v971, %v971
        %v973 = vsel %vm359, %v972, 0.0
        %974 = vadd.xlane.f32.xlu0 %v973
        %v975 = vpop.xlane.xlu0 %974
        %v976 = vrot.slane %v975, 4
        %v977 = vadd.f32 %v975, %v976
        %v978 = vrot.slane %v977, 2
        %v979 = vadd.f32 %v977, %v978
        %v980 = vrot.slane %v979, 1
        %v981 = vadd.f32 %v979, %v980
        %s982 = vtos %v981
        %v983 = vrcp.pop 256.0
        %v984 = vmul.f32 256.0, %v983
        %v985 = vsub.f32 1.0, %v984
        %v986 = vmul.f32 %v983, %v985
        %v987 = vadd.f32 %v983, %v986
        %vm988 = vweird.f32 %v983
        %v989 = vsel %vm988, %v983, %v987
        %s990 = vtos %v989
        %s991 = smul.f32 %s982, %s990
        %s992 = sadd.f32 %s991, 1e-05
        %v993 = vstv %s992
        %v994 = vrsqrt.pop %v993
        %v995 = vmul.f32 %v994, %v993
        %v996 = vmul.f32 %v995, %v994
        %v997 = vmul.f32 0.5, %v996
        %v998 = vsub.f32 1.5, %v997
        %v999 = vmul.f32 %v994, %v998
        %vm1000 = vweird.f32 %v993
        %vm1001 = vweird.f32 %v994
        %vm1002 = vmor %vm1000, %vm1001
        %v1003 = vsel %vm1002, %v994, %v999
        %s1004 = vtos %v1003
        %v1005 = vstv %s1004
        %v1006 = vmul.f32 %v971, %v1005
        %v1007 = vld [vmem:[%s5] sm:$0xff]
        %v1008 = vld [vmem:[%s5 + $0x8] sm:$0xff]
        %v1009 = vld [vmem:[%s5 + $0x10] sm:$0xff]
        %v1010 = vld [vmem:[%s5 + $0x18] sm:$0xff]
        %v1011 = vld [vmem:[%s6] sm:$0x1]
        %v1013 = vperm.slane %v1011, 0
        %v1016 = vsel %vm359, %v1006, 0
        %1018 = vmatpush.msra.mxu0 0.0
        %1019 = vmatpush.msra.mxu0 0.0
        %1020 = vmatpush.msra.mxu0 0.0
        %1021 = vmatpush.msra.mxu0 0.0
        %1022 = vmatpush.msra.mxu0 0.0
        %1023 = vmatpush.msra.mxu0 0.0
        %1024 = vmatpush.msra.mxu0 0.0
        %1025 = vmatpush.msra.mxu0 0.0
        %1026 = vmatpush.msra.mxu0 0.0
        %1027 = vmatpush.msra.mxu0 0.0
        %1028 = vmatpush.msra.mxu0 0.0
        %1029 = vmatpush.msra.mxu0 0.0
        %1030 = vmatpush.msra.mxu0 %v1010
        %1031 = vmatpush.msra.mxu0 %v1009
        %1032 = vmatpush.msra.mxu0 %v1008
        %1033 = vmatpush.msra.mxu0 %v1007
        %1034 = vmatmul.f32.gmra.mxu0 %v1016
        %v1035 = vpop.f32.mrf.mxu0
        %v1036 = vadd.f32 %v1013, %v1035
        %1037 = vdwg.mxu0
        %v1038 = vmax.f32 %v1036, 0.0
        %v1039 = vld [vmem:[%s7] sm:$0xff]
        %v1040 = vld [vmem:[%s7 + $0x8] sm:$0xff]
        %v1041 = vld [vmem:[%s7 + $0x10] sm:$0xff]
        %v1042 = vld [vmem:[%s7 + $0x18] sm:$0xff]
        %v1043 = vld [vmem:[%s7 + $0x20] sm:$0xff]
        %v1044 = vld [vmem:[%s7 + $0x28] sm:$0xff]
        %v1045 = vld [vmem:[%s7 + $0x30] sm:$0xff]
        %v1046 = vld [vmem:[%s7 + $0x38] sm:$0xff]
        %v1047 = vld [vmem:[%s8] sm:$0x1]
        %v1049 = vperm.slane %v1047, 0
        %vm1051 = vcmask 523264
        %v1053 = vsel %vm1051, %v1038, 0
        %1055 = vmatpush.msra.mxu0 0.0
        %1056 = vmatpush.msra.mxu0 0.0
        %1057 = vmatpush.msra.mxu0 0.0
        %1058 = vmatpush.msra.mxu0 0.0
        %1059 = vmatpush.msra.mxu0 0.0
        %1060 = vmatpush.msra.mxu0 0.0
        %1061 = vmatpush.msra.mxu0 0.0
        %1062 = vmatpush.msra.mxu0 0.0
        %1063 = vmatpush.msra.mxu0 %v1046
        %1064 = vmatpush.msra.mxu0 %v1045
        %1065 = vmatpush.msra.mxu0 %v1044
        %1066 = vmatpush.msra.mxu0 %v1043
        %1067 = vmatpush.msra.mxu0 %v1042
        %1068 = vmatpush.msra.mxu0 %v1041
        %1069 = vmatpush.msra.mxu0 %v1040
        %1070 = vmatpush.msra.mxu0 %v1039
        %1071 = vmatmul.f32.gmra.mxu0 %v1053
        %v1072 = vpop.f32.mrf.mxu0
        %v1073 = vadd.f32 %v1049, %v1072
        %1074 = vdwg.mxu0
        %v1075 = vadd.f32 %v1073, %v1006
        %v1076 = vsel %vm359, %v1075, 0.0
        %1077 = vadd.xlane.f32.xlu0 %v1076
        %v1078 = vpop.xlane.xlu0 %1077
        %v1079 = vrot.slane %v1078, 4
        %v1080 = vadd.f32 %v1078, %v1079
        %v1081 = vrot.slane %v1080, 2
        %v1082 = vadd.f32 %v1080, %v1081
        %v1083 = vrot.slane %v1082, 1
        %v1084 = vadd.f32 %v1082, %v1083
        %s1085 = vtos %v1084
        %v1086 = vrcp.pop 256.0
        %v1087 = vmul.f32 256.0, %v1086
        %v1088 = vsub.f32 1.0, %v1087
        %v1089 = vmul.f32 %v1086, %v1088
        %v1090 = vadd.f32 %v1086, %v1089
        %vm1091 = vweird.f32 %v1086
        %v1092 = vsel %vm1091, %v1086, %v1090
        %s1093 = vtos %v1092
        %s1094 = smul.f32 %s1085, %s1093
        %v1095 = vstv %s1094
        %v1096 = vsub.f32 %v1075, %v1095
        %v1097 = vmul.f32 %v1096, %v1096
        %v1098 = vsel %vm359, %v1097, 0.0
        %1099 = vadd.xlane.f32.xlu0 %v1098
        %v1100 = vpop.xlane.xlu0 %1099
        %v1101 = vrot.slane %v1100, 4
        %v1102 = vadd.f32 %v1100, %v1101
        %v1103 = vrot.slane %v1102, 2
        %v1104 = vadd.f32 %v1102, %v1103
        %v1105 = vrot.slane %v1104, 1
        %v1106 = vadd.f32 %v1104, %v1105
        %s1107 = vtos %v1106
        %v1108 = vrcp.pop 256.0
        %v1109 = vmul.f32 256.0, %v1108
        %v1110 = vsub.f32 1.0, %v1109
        %v1111 = vmul.f32 %v1108, %v1110
        %v1112 = vadd.f32 %v1108, %v1111
        %vm1113 = vweird.f32 %v1108
        %v1114 = vsel %vm1113, %v1108, %v1112
        %s1115 = vtos %v1114
        %s1116 = smul.f32 %s1107, %s1115
        %s1117 = sadd.f32 %s1116, 1e-05
        %v1118 = vstv %s1117
        %v1119 = vrsqrt.pop %v1118
        %v1120 = vmul.f32 %v1119, %v1118
        %v1121 = vmul.f32 %v1120, %v1119
        %v1122 = vmul.f32 0.5, %v1121
        %v1123 = vsub.f32 1.5, %v1122
        %v1124 = vmul.f32 %v1119, %v1123
        %vm1125 = vweird.f32 %v1118
        %vm1126 = vweird.f32 %v1119
        %vm1127 = vmor %vm1125, %vm1126
        %v1128 = vsel %vm1127, %v1119, %v1124
        %s1129 = vtos %v1128
        %v1130 = vstv %s1129
        %v1131 = vmul.f32 %v1096, %v1130
        %1132 = vst.msk [vmem:[%s349] sm:$0xff] %vm359, %v1131
        %s1133 = sand.u32 %s228, 1
        %s1134 = scalar_lea.sflag [#allocation5], %s1133
        %s1135 = sand.u32 %s228, 1
        %s1136 = smul.addr %s1135, 8
        %s1137 = scalar_lea.vmem [#allocation6], %s1136
        // Predicated region
        $region61: #{tpu_custom_call.1} parent=55 // pred_check
          %p1138 = pneg %p238
        $region62: #{tpu_custom_call.1} parent=55 // pred_check_branch
          %1140 = sbr.rel (%p1138) target = $region64
        $region63: #{tpu_custom_call.1} parent=55 // pred_region
          %1142 = vsyncadd %s1134, 0
          %s1143 = smul.addr %s26, 8
          %s1144 = scalar_lea.hbm %s9, %s1143
          %s1146 = sshll.u32 %s1137, 4
          %s1147 = int_to_ptr.vmem [resolvable:$true] %s1146
          %s1148 = sshll.u32 %s1144, 4
          %s1149 = int_to_ptr.hbm [resolvable:$true] %s1148
          %1151 = dma.vmem_to_hbm [thread:$0]  %s1147, 128, %s1149, %s1134
        $region64: #{tpu_custom_call.1} parent=55 // pred_fallthru
          _
      $region56: #{tpu_custom_call.1} parent=5 // pred_fallthru
        _
      %p1152 = scmp.le.s32.totalorder 2, %s21
      // Predicated region
      $region65: #{tpu_custom_call.1} parent=5 // pred_check
        %p1153 = pneg %p1152
      $region66: #{tpu_custom_call.1} parent=5 // pred_check_branch
        %1155 = sbr.rel (%p1153) target = $region68
      $region67: #{tpu_custom_call.1} parent=5 // pred_region
        %s1156 = ssub.s32 %s21, 2
        // Predicated region
        $region69: #{tpu_custom_call.1} parent=67 // pred_check
          %p1157 = pneg %p244
        $region70: #{tpu_custom_call.1} parent=67 // pred_check_branch
          %1159 = sbr.rel (%p1157) target = $region72
        $region71: #{tpu_custom_call.1} parent=67 // pred_region
          %s1160 = sand.u32 %s229, 1
          %s1161 = scalar_lea.sflag [#allocation5], %s1160
          %s1162 = sand.u32 %s229, 1
          %s1163 = smul.addr %s1162, 8
          %s1164 = scalar_lea.vmem [#allocation6], %s1163
          %1166 = dma.done %s1161, 128
        $region72: #{tpu_custom_call.1} parent=67 // pred_fallthru
          _
      $region68: #{tpu_custom_call.1} parent=5 // pred_fallthru
        _
    $region6: #{tpu_custom_call.1} parent=1 // loop_footer
      %s25 = sadd.s32 1, %s21
    $region7: #{tpu_custom_call.1} parent=1 // loop_footer_branch
      %20 = sbr.rel target = $region3
    $region8: #{tpu_custom_call.1} parent=1 // loop_exit
      _
    %1167 = vsyncpa [#allocation4], 1
    %s1168 = scalar_lea.sflag [#allocation4], 1
    %1169 = vsyncpa %s1168, 1
    %1170 = vsyncpa [#allocation5], 1
    %s1171 = scalar_lea.sflag [#allocation5], 1
    %1172 = vsyncpa %s1171, 1

</llo_original>
